<compile_context>
chip_gen: v7x
topology: tpu7x:2x2x1
jax: 0.10.0
libtpu: 0.0.40
codegen_flags: <defaults>
</compile_context>

<pallas_src>
import jax
import jax.numpy as jnp
from jax.experimental import pallas as pl
from jax.experimental.pallas import tpu as pltpu

N_HEADS = 2
LN_EPS = 1e-5

PARAM_ORDER = ["wemb", "bemb",
               "g0", "b0",
               "g1", "b1",
               "wqkv", "bqkv",
               "wo", "bo",
               "g2", "b2",
               "wm1", "bm1", "wm2", "bm2"]

# weight matrices fed to the MXU -> cast to bf16 in the wrapper
BF16_PARAMS = {"wemb", "wqkv", "wo", "wm1", "wm2"}


def _layernorm(v, g, b):
    # one-pass: mean and E[x^2] computed from the same operand (2 XLU
    # reductions instead of 3 dependent ones)
    mu = jnp.mean(v, axis=-1, keepdims=True)
    ex2 = jnp.mean(v * v, axis=-1, keepdims=True)
    var = ex2 - mu * mu
    return (v - mu) * jax.lax.rsqrt(var + LN_EPS) * g + b


def crossformer_encoder_kernel(
    pcat_ref,
    wemb_ref, bemb_ref,
    g0_ref, b0_ref,
    g1_ref, b1_ref,
    wqkv_ref, bqkv_ref,
    wo_ref, bo_ref,
    g2_ref, b2_ref,
    wm1_ref, bm1_ref, wm2_ref, bm2_ref,
    o_ref):
    f32 = jnp.float32
    bf16 = jnp.bfloat16

    # ---- fused cross-scale embedding: (N, 80) @ (80, D) ----
    p = pcat_ref[...]                                   # (N, 80) bf16
    x = (jnp.dot(p, wemb_ref[...], preferred_element_type=f32)
         + bemb_ref[...])                               # (N, D) f32
    x = _layernorm(x, g0_ref[...], b0_ref[...])

    # ---- transformer block: multi-head self attention ----
    h = _layernorm(x, g1_ref[...], b1_ref[...]).astype(bf16)
    qkv = (jnp.dot(h, wqkv_ref[...], preferred_element_type=f32)
           + bqkv_ref[...])                             # (N, 3D) f32

    d = x.shape[-1]
    dh = d // N_HEADS
    scale = 1.0 / (dh ** 0.5)

    # fold the softmax scale into q before casting to bf16
    q = (qkv[:, :d] * scale).astype(bf16)
    k = qkv[:, d:2 * d].astype(bf16)
    v = qkv[:, 2 * d:3 * d].astype(bf16)

    heads = []
    for hd in range(N_HEADS):                           # static unroll
        sl = slice(hd * dh, (hd + 1) * dh)
        qh, kh, vh = q[:, sl], k[:, sl], v[:, sl]
        # scores without materializing a transpose: contract dh of both
        s = jax.lax.dot_general(qh, kh, (((1,), (1,)), ((), ())),
                                preferred_element_type=f32)   # (N, N)
        m = jnp.max(s, axis=-1, keepdims=True)
        e = jnp.exp(s - m)
        denom = jnp.sum(e, axis=-1, keepdims=True)
        oh = jnp.dot(e.astype(bf16), vh, preferred_element_type=f32)
        # EUP approx reciprocal instead of a VPU divide over (N, N)
        heads.append(oh * pl.reciprocal(denom, approx=True))  # (N, dh)

    oh_cat = jnp.concatenate(heads, axis=-1).astype(bf16)     # (N, D)
    x = (x + jnp.dot(oh_cat, wo_ref[...], preferred_element_type=f32)
         + bo_ref[...])

    # ---- transformer block: MLP (GELU, tanh approx) ----
    h2 = _layernorm(x, g2_ref[...], b2_ref[...]).astype(bf16)
    m1 = (jnp.dot(h2, wm1_ref[...], preferred_element_type=f32)
          + bm1_ref[...])
    g = 0.5 * m1 * (1.0 + jnp.tanh(0.7978845608028654
                                   * (m1 + 0.044715 * m1 * m1 * m1)))
    x = (x + jnp.dot(g.astype(bf16), wm2_ref[...], preferred_element_type=f32)
         + bm2_ref[...])

    o_ref[...] = x.astype(o_ref.dtype)


def init_params(key, p1_dim=16, p2_dim=64, d=32, mlp=128):
    ks = jax.random.split(key, 8)
    s = 0.02
    half = d // 2
    # two per-scale projections laid out as one fused (p1_dim + p2_dim, d)
    # weight acting on the lane-concatenated patch vector [p1 | p2]
    w1 = jax.random.normal(ks[0], (p1_dim, half), jnp.float32) * s
    w2 = jax.random.normal(ks[1], (p2_dim, half), jnp.float32) * s
    wemb = jnp.zeros((p1_dim + p2_dim, d), jnp.float32)
    wemb = wemb.at[:p1_dim, :half].set(w1)
    wemb = wemb.at[p1_dim:, half:].set(w2)
    bemb = jax.random.normal(ks[2], (1, d), jnp.float32) * s

    wq = jax.random.normal(ks[3], (d, d), jnp.float32) * s
    wk = jax.random.normal(ks[4], (d, d), jnp.float32) * s
    wv = jax.random.normal(ks[5], (d, d), jnp.float32) * s
    return dict(
        wemb=wemb, bemb=bemb,
        g0=jnp.ones((1, d), jnp.float32), b0=jnp.zeros((1, d), jnp.float32),
        g1=jnp.ones((1, d), jnp.float32), b1=jnp.zeros((1, d), jnp.float32),
        wqkv=jnp.concatenate([wq, wk, wv], axis=1),          # (d, 3d)
        bqkv=jnp.zeros((1, 3 * d), jnp.float32),
        wo=jax.random.normal(ks[6], (d, d), jnp.float32) * s,
        bo=jnp.zeros((1, d), jnp.float32),
        g2=jnp.ones((1, d), jnp.float32), b2=jnp.zeros((1, d), jnp.float32),
        wm1=jax.random.normal(ks[7], (d, mlp), jnp.float32) * s,
        bm1=jnp.zeros((1, mlp), jnp.float32),
        wm2=jax.random.normal(ks[0], (mlp, d), jnp.float32) * s,
        bm2=jnp.zeros((1, d), jnp.float32),
    )


def discriminator_forward(x, params):
    """x: [B, 1, H, W] NCHW -> f_features: [B, N, D]."""
    B, C, H, W = x.shape
    assert C == 1, "cross_params[0].input_dim = 1"
    n = (H // 4) * (W // 4)

    # glue: patch extraction (im2col) stays in plain JAX; both scales are
    # concatenated on the lane axis so the kernel does ONE embedding matmul.
    p1 = x.reshape(B, C, H // 4, 4, W // 4, 4)
    p1 = p1.transpose(0, 2, 4, 1, 3, 5).reshape(B, n, C * 16)        # 4x4/s4
    p2 = jax.lax.conv_general_dilated_patches(
        x, filter_shape=(8, 8), window_strides=(4, 4),
        padding=((2, 2), (2, 2)))                                    # 8x8/s4
    p2 = p2.reshape(B, C * 64, n).transpose(0, 2, 1)                 # [B,n,64]
    pcat = jnp.concatenate([p1, p2], axis=-1).astype(jnp.bfloat16)   # [B,n,80]

    d = params["wo"].shape[0]
    plist = [params[k].astype(jnp.bfloat16) if k in BF16_PARAMS else params[k]
             for k in PARAM_ORDER]

    in_specs = [
        pl.BlockSpec((None, n, pcat.shape[-1]), lambda b: (b, 0, 0)),
    ] + [pl.BlockSpec(p.shape, lambda b: (0, 0)) for p in plist]

    # TODO(synk): for large N, fold N*D into a 128-wide lane-dense output
    # block and/or tile KV flash-style; at this size the writeback is tiny.
    return pl.pallas_call(
        crossformer_encoder_kernel,
        out_shape=jax.ShapeDtypeStruct((B, n, d), jnp.float32),
        grid=(B,),
        in_specs=in_specs,
        out_specs=pl.BlockSpec((None, n, d), lambda b: (b, 0, 0)),
        compiler_params=pltpu.CompilerParams(
            dimension_semantics=("parallel",)),
    )(pcat, *plist)


if __name__ == "__main__":
    key = jax.random.PRNGKey(0)
    x = jax.random.normal(key, (2, 1, 16, 16), dtype=jnp.float32)   # NCHW, C=1
    params = init_params(jax.random.PRNGKey(1))
    f_features = discriminator_forward(x, params)
    jax.block_until_ready(f_features)
    assert f_features.shape == (2, 16, 32)
    assert bool(jnp.all(jnp.isfinite(f_features)))
    print("KERNEL_OK")
</pallas_src>

<mosaic_0001>
module attributes {stable_mosaic.version = 11 : i64} {
  func.func @crossformer_encoder_kernel(%arg0: i32, %arg1: memref<1x16x80xbf16, #tpu.memory_space<vmem>>, %arg2: memref<80x32xbf16, #tpu.memory_space<vmem>>, %arg3: memref<1x32xf32, #tpu.memory_space<vmem>>, %arg4: memref<1x32xf32, #tpu.memory_space<vmem>>, %arg5: memref<1x32xf32, #tpu.memory_space<vmem>>, %arg6: memref<1x32xf32, #tpu.memory_space<vmem>>, %arg7: memref<1x32xf32, #tpu.memory_space<vmem>>, %arg8: memref<32x96xbf16, #tpu.memory_space<vmem>>, %arg9: memref<1x96xf32, #tpu.memory_space<vmem>>, %arg10: memref<32x32xbf16, #tpu.memory_space<vmem>>, %arg11: memref<1x32xf32, #tpu.memory_space<vmem>>, %arg12: memref<1x32xf32, #tpu.memory_space<vmem>>, %arg13: memref<1x32xf32, #tpu.memory_space<vmem>>, %arg14: memref<32x128xbf16, #tpu.memory_space<vmem>>, %arg15: memref<1x128xf32, #tpu.memory_space<vmem>>, %arg16: memref<128x32xbf16, #tpu.memory_space<vmem>>, %arg17: memref<1x32xf32, #tpu.memory_space<vmem>>, %arg18: memref<1x16x32xf32, #tpu.memory_space<vmem>>) attributes {dimension_semantics = [#tpu.dimension_semantics<parallel>], iteration_bounds = array<i64: 2>, scalar_prefetch = 0 : i64, scratch_operands = 0 : i64, tpu.core_type = #tpu.core_type<tc>, window_params = [{transform_indices = @transform_0, window_bounds = array<i64: 1, 16, 80>}, {pipeline_mode = #tpu.pipeline_mode<synchronous>, transform_indices = @transform_1, window_bounds = array<i64: 80, 32>}, {pipeline_mode = #tpu.pipeline_mode<synchronous>, transform_indices = @transform_2, window_bounds = array<i64: 1, 32>}, {pipeline_mode = #tpu.pipeline_mode<synchronous>, transform_indices = @transform_3, window_bounds = array<i64: 1, 32>}, {pipeline_mode = #tpu.pipeline_mode<synchronous>, transform_indices = @transform_4, window_bounds = array<i64: 1, 32>}, {pipeline_mode = #tpu.pipeline_mode<synchronous>, transform_indices = @transform_5, window_bounds = array<i64: 1, 32>}, {pipeline_mode = #tpu.pipeline_mode<synchronous>, transform_indices = @transform_6, window_bounds = array<i64: 1, 32>}, {pipeline_mode = #tpu.pipeline_mode<synchronous>, transform_indices = @transform_7, window_bounds = array<i64: 32, 96>}, {pipeline_mode = #tpu.pipeline_mode<synchronous>, transform_indices = @transform_8, window_bounds = array<i64: 1, 96>}, {pipeline_mode = #tpu.pipeline_mode<synchronous>, transform_indices = @transform_9, window_bounds = array<i64: 32, 32>}, {pipeline_mode = #tpu.pipeline_mode<synchronous>, transform_indices = @transform_10, window_bounds = array<i64: 1, 32>}, {pipeline_mode = #tpu.pipeline_mode<synchronous>, transform_indices = @transform_11, window_bounds = array<i64: 1, 32>}, {pipeline_mode = #tpu.pipeline_mode<synchronous>, transform_indices = @transform_12, window_bounds = array<i64: 1, 32>}, {pipeline_mode = #tpu.pipeline_mode<synchronous>, transform_indices = @transform_13, window_bounds = array<i64: 32, 128>}, {pipeline_mode = #tpu.pipeline_mode<synchronous>, transform_indices = @transform_14, window_bounds = array<i64: 1, 128>}, {pipeline_mode = #tpu.pipeline_mode<synchronous>, transform_indices = @transform_15, window_bounds = array<i64: 128, 32>}, {pipeline_mode = #tpu.pipeline_mode<synchronous>, transform_indices = @transform_16, window_bounds = array<i64: 1, 32>}, {transform_indices = @transform_17, window_bounds = array<i64: 1, 16, 32>}]} {
    %c0 = arith.constant 0 : index
    %c0_0 = arith.constant 0 : index
    %c0_1 = arith.constant 0 : index
    %0 = vector.load %arg1[%c0, %c0_0, %c0_1] : memref<1x16x80xbf16, #tpu.memory_space<vmem>>, vector<1x16x80xbf16>
    %1 = vector.shape_cast %0 : vector<1x16x80xbf16> to vector<16x80xbf16>
    %c0_2 = arith.constant 0 : index
    %c0_3 = arith.constant 0 : index
    %2 = vector.load %arg2[%c0_2, %c0_3] : memref<80x32xbf16, #tpu.memory_space<vmem>>, vector<80x32xbf16>
    %cst = arith.constant dense<0.000000e+00> : vector<16x32xf32>
    %3 = tpu.matmul %1, %2, %cst {dimension_numbers = #tpu.dot_dimension_numbers<[1], [0], [0], [1], [0, 0, 1, 1], [], []>} : vector<16x80xbf16>, vector<80x32xbf16>, vector<16x32xf32> -> vector<16x32xf32>
    %c0_4 = arith.constant 0 : index
    %c0_5 = arith.constant 0 : index
    %4 = vector.load %arg3[%c0_4, %c0_5] : memref<1x32xf32, #tpu.memory_space<vmem>>, vector<1x32xf32>
    %5 = vector.broadcast %4 : vector<1x32xf32> to vector<16x32xf32>
    %6 = arith.addf %3, %5 : vector<16x32xf32>
    %c0_6 = arith.constant 0 : index
    %c0_7 = arith.constant 0 : index
    %7 = vector.load %arg4[%c0_6, %c0_7] : memref<1x32xf32, #tpu.memory_space<vmem>>, vector<1x32xf32>
    %c0_8 = arith.constant 0 : index
    %c0_9 = arith.constant 0 : index
    %8 = vector.load %arg5[%c0_8, %c0_9] : memref<1x32xf32, #tpu.memory_space<vmem>>, vector<1x32xf32>
    %cst_10 = arith.constant dense<0.000000e+00> : vector<16xf32>
    %9 = vector.multi_reduction <add>, %6, %cst_10 [1] : vector<16x32xf32> to vector<16xf32>
    %10 = vector.shape_cast %9 : vector<16xf32> to vector<16x1xf32>
    %cst_11 = arith.constant 3.200000e+01 : f32
    %11 = vector.broadcast %cst_11 : f32 to vector<16x1xf32>
    %12 = arith.divf %10, %11 : vector<16x1xf32>
    %13 = arith.mulf %6, %6 : vector<16x32xf32>
    %cst_12 = arith.constant dense<0.000000e+00> : vector<16xf32>
    %14 = vector.multi_reduction <add>, %13, %cst_12 [1] : vector<16x32xf32> to vector<16xf32>
    %15 = vector.shape_cast %14 : vector<16xf32> to vector<16x1xf32>
    %cst_13 = arith.constant 3.200000e+01 : f32
    %16 = vector.broadcast %cst_13 : f32 to vector<16x1xf32>
    %17 = arith.divf %15, %16 : vector<16x1xf32>
    %18 = arith.mulf %12, %12 : vector<16x1xf32>
    %19 = arith.subf %17, %18 : vector<16x1xf32>
    %20 = vector.broadcast %12 : vector<16x1xf32> to vector<16x32xf32>
    %21 = arith.subf %6, %20 : vector<16x32xf32>
    %cst_14 = arith.constant 9.99999974E-6 : f32
    %22 = vector.broadcast %cst_14 : f32 to vector<16x1xf32>
    %23 = arith.addf %19, %22 : vector<16x1xf32>
    %24 = math.rsqrt %23 : vector<16x1xf32>
    %25 = vector.broadcast %24 : vector<16x1xf32> to vector<16x32xf32>
    %26 = arith.mulf %21, %25 : vector<16x32xf32>
    %27 = vector.broadcast %7 : vector<1x32xf32> to vector<16x32xf32>
    %28 = arith.mulf %26, %27 : vector<16x32xf32>
    %29 = vector.broadcast %8 : vector<1x32xf32> to vector<16x32xf32>
    %30 = arith.addf %28, %29 : vector<16x32xf32>
    %c0_15 = arith.constant 0 : index
    %c0_16 = arith.constant 0 : index
    %31 = vector.load %arg6[%c0_15, %c0_16] : memref<1x32xf32, #tpu.memory_space<vmem>>, vector<1x32xf32>
    %c0_17 = arith.constant 0 : index
    %c0_18 = arith.constant 0 : index
    %32 = vector.load %arg7[%c0_17, %c0_18] : memref<1x32xf32, #tpu.memory_space<vmem>>, vector<1x32xf32>
    %cst_19 = arith.constant dense<0.000000e+00> : vector<16xf32>
    %33 = vector.multi_reduction <add>, %30, %cst_19 [1] : vector<16x32xf32> to vector<16xf32>
    %34 = vector.shape_cast %33 : vector<16xf32> to vector<16x1xf32>
    %cst_20 = arith.constant 3.200000e+01 : f32
    %35 = vector.broadcast %cst_20 : f32 to vector<16x1xf32>
    %36 = arith.divf %34, %35 : vector<16x1xf32>
    %37 = arith.mulf %30, %30 : vector<16x32xf32>
    %cst_21 = arith.constant dense<0.000000e+00> : vector<16xf32>
    %38 = vector.multi_reduction <add>, %37, %cst_21 [1] : vector<16x32xf32> to vector<16xf32>
    %39 = vector.shape_cast %38 : vector<16xf32> to vector<16x1xf32>
    %cst_22 = arith.constant 3.200000e+01 : f32
    %40 = vector.broadcast %cst_22 : f32 to vector<16x1xf32>
    %41 = arith.divf %39, %40 : vector<16x1xf32>
    %42 = arith.mulf %36, %36 : vector<16x1xf32>
    %43 = arith.subf %41, %42 : vector<16x1xf32>
    %44 = vector.broadcast %36 : vector<16x1xf32> to vector<16x32xf32>
    %45 = arith.subf %30, %44 : vector<16x32xf32>
    %cst_23 = arith.constant 9.99999974E-6 : f32
    %46 = vector.broadcast %cst_23 : f32 to vector<16x1xf32>
    %47 = arith.addf %43, %46 : vector<16x1xf32>
    %48 = math.rsqrt %47 : vector<16x1xf32>
    %49 = vector.broadcast %48 : vector<16x1xf32> to vector<16x32xf32>
    %50 = arith.mulf %45, %49 : vector<16x32xf32>
    %51 = vector.broadcast %31 : vector<1x32xf32> to vector<16x32xf32>
    %52 = arith.mulf %50, %51 : vector<16x32xf32>
    %53 = vector.broadcast %32 : vector<1x32xf32> to vector<16x32xf32>
    %54 = arith.addf %52, %53 : vector<16x32xf32>
    %55 = arith.truncf %54 : vector<16x32xf32> to vector<16x32xbf16>
    %c0_24 = arith.constant 0 : index
    %c0_25 = arith.constant 0 : index
    %56 = vector.load %arg8[%c0_24, %c0_25] : memref<32x96xbf16, #tpu.memory_space<vmem>>, vector<32x96xbf16>
    %cst_26 = arith.constant dense<0.000000e+00> : vector<16x96xf32>
    %57 = tpu.matmul %55, %56, %cst_26 {dimension_numbers = #tpu.dot_dimension_numbers<[1], [0], [0], [1], [0, 0, 1, 1], [], []>} : vector<16x32xbf16>, vector<32x96xbf16>, vector<16x96xf32> -> vector<16x96xf32>
    %c0_27 = arith.constant 0 : index
    %c0_28 = arith.constant 0 : index
    %58 = vector.load %arg9[%c0_27, %c0_28] : memref<1x96xf32, #tpu.memory_space<vmem>>, vector<1x96xf32>
    %59 = vector.broadcast %58 : vector<1x96xf32> to vector<16x96xf32>
    %60 = arith.addf %57, %59 : vector<16x96xf32>
    %61 = vector.extract_strided_slice %60 {offsets = [0, 0], sizes = [16, 32], strides = [1, 1]} : vector<16x96xf32> to vector<16x32xf32>
    %cst_29 = arith.constant 2.500000e-01 : f32
    %62 = vector.broadcast %cst_29 : f32 to vector<16x32xf32>
    %63 = arith.mulf %61, %62 : vector<16x32xf32>
    %64 = arith.truncf %63 : vector<16x32xf32> to vector<16x32xbf16>
    %65 = vector.extract_strided_slice %60 {offsets = [0, 32], sizes = [16, 32], strides = [1, 1]} : vector<16x96xf32> to vector<16x32xf32>
    %66 = arith.truncf %65 : vector<16x32xf32> to vector<16x32xbf16>
    %67 = vector.extract_strided_slice %60 {offsets = [0, 64], sizes = [16, 32], strides = [1, 1]} : vector<16x96xf32> to vector<16x32xf32>
    %68 = arith.truncf %67 : vector<16x32xf32> to vector<16x32xbf16>
    %69 = vector.extract_strided_slice %64 {offsets = [0, 0], sizes = [16, 16], strides = [1, 1]} : vector<16x32xbf16> to vector<16x16xbf16>
    %70 = vector.extract_strided_slice %66 {offsets = [0, 0], sizes = [16, 16], strides = [1, 1]} : vector<16x32xbf16> to vector<16x16xbf16>
    %71 = vector.extract_strided_slice %68 {offsets = [0, 0], sizes = [16, 16], strides = [1, 1]} : vector<16x32xbf16> to vector<16x16xbf16>
    %cst_30 = arith.constant dense<0.000000e+00> : vector<16x16xf32>
    %72 = tpu.matmul %69, %70, %cst_30 {dimension_numbers = #tpu.dot_dimension_numbers<[1], [1], [0], [0], [0, 0, 1, 0], [], []>} : vector<16x16xbf16>, vector<16x16xbf16>, vector<16x16xf32> -> vector<16x16xf32>
    %cst_31 = arith.constant dense<0xFF800000> : vector<16xf32>
    %73 = vector.multi_reduction <maximumf>, %72, %cst_31 [1] : vector<16x16xf32> to vector<16xf32>
    %74 = vector.shape_cast %73 : vector<16xf32> to vector<16x1xf32>
    %75 = vector.broadcast %74 : vector<16x1xf32> to vector<16x16xf32>
    %76 = arith.subf %72, %75 : vector<16x16xf32>
    %77 = math.exp %76 : vector<16x16xf32>
    %cst_32 = arith.constant dense<0.000000e+00> : vector<16xf32>
    %78 = vector.multi_reduction <add>, %77, %cst_32 [1] : vector<16x16xf32> to vector<16xf32>
    %79 = vector.shape_cast %78 : vector<16xf32> to vector<16x1xf32>
    %80 = arith.truncf %77 : vector<16x16xf32> to vector<16x16xbf16>
    %cst_33 = arith.constant dense<0.000000e+00> : vector<16x16xf32>
    %81 = tpu.matmul %80, %71, %cst_33 {dimension_numbers = #tpu.dot_dimension_numbers<[1], [0], [0], [1], [0, 0, 1, 1], [], []>} : vector<16x16xbf16>, vector<16x16xbf16>, vector<16x16xf32> -> vector<16x16xf32>
    %82 = tpu.reciprocal %79 {approx = true} : vector<16x1xf32> -> vector<16x1xf32>
    %83 = vector.broadcast %82 : vector<16x1xf32> to vector<16x16xf32>
    %84 = arith.mulf %81, %83 : vector<16x16xf32>
    %85 = vector.extract_strided_slice %64 {offsets = [0, 16], sizes = [16, 16], strides = [1, 1]} : vector<16x32xbf16> to vector<16x16xbf16>
    %86 = vector.extract_strided_slice %66 {offsets = [0, 16], sizes = [16, 16], strides = [1, 1]} : vector<16x32xbf16> to vector<16x16xbf16>
    %87 = vector.extract_strided_slice %68 {offsets = [0, 16], sizes = [16, 16], strides = [1, 1]} : vector<16x32xbf16> to vector<16x16xbf16>
    %cst_34 = arith.constant dense<0.000000e+00> : vector<16x16xf32>
    %88 = tpu.matmul %85, %86, %cst_34 {dimension_numbers = #tpu.dot_dimension_numbers<[1], [1], [0], [0], [0, 0, 1, 0], [], []>} : vector<16x16xbf16>, vector<16x16xbf16>, vector<16x16xf32> -> vector<16x16xf32>
    %cst_35 = arith.constant dense<0xFF800000> : vector<16xf32>
    %89 = vector.multi_reduction <maximumf>, %88, %cst_35 [1] : vector<16x16xf32> to vector<16xf32>
    %90 = vector.shape_cast %89 : vector<16xf32> to vector<16x1xf32>
    %91 = vector.broadcast %90 : vector<16x1xf32> to vector<16x16xf32>
    %92 = arith.subf %88, %91 : vector<16x16xf32>
    %93 = math.exp %92 : vector<16x16xf32>
    %cst_36 = arith.constant dense<0.000000e+00> : vector<16xf32>
    %94 = vector.multi_reduction <add>, %93, %cst_36 [1] : vector<16x16xf32> to vector<16xf32>
    %95 = vector.shape_cast %94 : vector<16xf32> to vector<16x1xf32>
    %96 = arith.truncf %93 : vector<16x16xf32> to vector<16x16xbf16>
    %cst_37 = arith.constant dense<0.000000e+00> : vector<16x16xf32>
    %97 = tpu.matmul %96, %87, %cst_37 {dimension_numbers = #tpu.dot_dimension_numbers<[1], [0], [0], [1], [0, 0, 1, 1], [], []>} : vector<16x16xbf16>, vector<16x16xbf16>, vector<16x16xf32> -> vector<16x16xf32>
    %98 = tpu.reciprocal %95 {approx = true} : vector<16x1xf32> -> vector<16x1xf32>
    %99 = vector.broadcast %98 : vector<16x1xf32> to vector<16x16xf32>
    %100 = arith.mulf %97, %99 : vector<16x16xf32>
    %101 = tpu.concatenate %84, %100 in 1 : vector<16x16xf32>, vector<16x16xf32> -> vector<16x32xf32>
    %102 = arith.truncf %101 : vector<16x32xf32> to vector<16x32xbf16>
    %c0_38 = arith.constant 0 : index
    %c0_39 = arith.constant 0 : index
    %103 = vector.load %arg10[%c0_38, %c0_39] : memref<32x32xbf16, #tpu.memory_space<vmem>>, vector<32x32xbf16>
    %cst_40 = arith.constant dense<0.000000e+00> : vector<16x32xf32>
    %104 = tpu.matmul %102, %103, %cst_40 {dimension_numbers = #tpu.dot_dimension_numbers<[1], [0], [0], [1], [0, 0, 1, 1], [], []>} : vector<16x32xbf16>, vector<32x32xbf16>, vector<16x32xf32> -> vector<16x32xf32>
    %105 = arith.addf %30, %104 : vector<16x32xf32>
    %c0_41 = arith.constant 0 : index
    %c0_42 = arith.constant 0 : index
    %106 = vector.load %arg11[%c0_41, %c0_42] : memref<1x32xf32, #tpu.memory_space<vmem>>, vector<1x32xf32>
    %107 = vector.broadcast %106 : vector<1x32xf32> to vector<16x32xf32>
    %108 = arith.addf %105, %107 : vector<16x32xf32>
    %c0_43 = arith.constant 0 : index
    %c0_44 = arith.constant 0 : index
    %109 = vector.load %arg12[%c0_43, %c0_44] : memref<1x32xf32, #tpu.memory_space<vmem>>, vector<1x32xf32>
    %c0_45 = arith.constant 0 : index
    %c0_46 = arith.constant 0 : index
    %110 = vector.load %arg13[%c0_45, %c0_46] : memref<1x32xf32, #tpu.memory_space<vmem>>, vector<1x32xf32>
    %cst_47 = arith.constant dense<0.000000e+00> : vector<16xf32>
    %111 = vector.multi_reduction <add>, %108, %cst_47 [1] : vector<16x32xf32> to vector<16xf32>
    %112 = vector.shape_cast %111 : vector<16xf32> to vector<16x1xf32>
    %cst_48 = arith.constant 3.200000e+01 : f32
    %113 = vector.broadcast %cst_48 : f32 to vector<16x1xf32>
    %114 = arith.divf %112, %113 : vector<16x1xf32>
    %115 = arith.mulf %108, %108 : vector<16x32xf32>
    %cst_49 = arith.constant dense<0.000000e+00> : vector<16xf32>
    %116 = vector.multi_reduction <add>, %115, %cst_49 [1] : vector<16x32xf32> to vector<16xf32>
    %117 = vector.shape_cast %116 : vector<16xf32> to vector<16x1xf32>
    %cst_50 = arith.constant 3.200000e+01 : f32
    %118 = vector.broadcast %cst_50 : f32 to vector<16x1xf32>
    %119 = arith.divf %117, %118 : vector<16x1xf32>
    %120 = arith.mulf %114, %114 : vector<16x1xf32>
    %121 = arith.subf %119, %120 : vector<16x1xf32>
    %122 = vector.broadcast %114 : vector<16x1xf32> to vector<16x32xf32>
    %123 = arith.subf %108, %122 : vector<16x32xf32>
    %cst_51 = arith.constant 9.99999974E-6 : f32
    %124 = vector.broadcast %cst_51 : f32 to vector<16x1xf32>
    %125 = arith.addf %121, %124 : vector<16x1xf32>
    %126 = math.rsqrt %125 : vector<16x1xf32>
    %127 = vector.broadcast %126 : vector<16x1xf32> to vector<16x32xf32>
    %128 = arith.mulf %123, %127 : vector<16x32xf32>
    %129 = vector.broadcast %109 : vector<1x32xf32> to vector<16x32xf32>
    %130 = arith.mulf %128, %129 : vector<16x32xf32>
    %131 = vector.broadcast %110 : vector<1x32xf32> to vector<16x32xf32>
    %132 = arith.addf %130, %131 : vector<16x32xf32>
    %133 = arith.truncf %132 : vector<16x32xf32> to vector<16x32xbf16>
    %c0_52 = arith.constant 0 : index
    %c0_53 = arith.constant 0 : index
    %134 = vector.load %arg14[%c0_52, %c0_53] : memref<32x128xbf16, #tpu.memory_space<vmem>>, vector<32x128xbf16>
    %cst_54 = arith.constant dense<0.000000e+00> : vector<16x128xf32>
    %135 = tpu.matmul %133, %134, %cst_54 {dimension_numbers = #tpu.dot_dimension_numbers<[1], [0], [0], [1], [0, 0, 1, 1], [], []>} : vector<16x32xbf16>, vector<32x128xbf16>, vector<16x128xf32> -> vector<16x128xf32>
    %c0_55 = arith.constant 0 : index
    %c0_56 = arith.constant 0 : index
    %136 = vector.load %arg15[%c0_55, %c0_56] : memref<1x128xf32, #tpu.memory_space<vmem>>, vector<1x128xf32>
    %137 = vector.broadcast %136 : vector<1x128xf32> to vector<16x128xf32>
    %138 = arith.addf %135, %137 : vector<16x128xf32>
    %cst_57 = arith.constant 5.000000e-01 : f32
    %139 = vector.broadcast %cst_57 : f32 to vector<16x128xf32>
    %140 = arith.mulf %139, %138 : vector<16x128xf32>
    %cst_58 = arith.constant 4.471500e-02 : f32
    %141 = vector.broadcast %cst_58 : f32 to vector<16x128xf32>
    %142 = arith.mulf %141, %138 : vector<16x128xf32>
    %143 = arith.mulf %142, %138 : vector<16x128xf32>
    %144 = arith.mulf %143, %138 : vector<16x128xf32>
    %145 = arith.addf %138, %144 : vector<16x128xf32>
    %cst_59 = arith.constant 0.797884583 : f32
    %146 = vector.broadcast %cst_59 : f32 to vector<16x128xf32>
    %147 = arith.mulf %146, %145 : vector<16x128xf32>
    %148 = math.tanh %147 : vector<16x128xf32>
    %cst_60 = arith.constant 1.000000e+00 : f32
    %149 = vector.broadcast %cst_60 : f32 to vector<16x128xf32>
    %150 = arith.addf %149, %148 : vector<16x128xf32>
    %151 = arith.mulf %140, %150 : vector<16x128xf32>
    %152 = arith.truncf %151 : vector<16x128xf32> to vector<16x128xbf16>
    %c0_61 = arith.constant 0 : index
    %c0_62 = arith.constant 0 : index
    %153 = vector.load %arg16[%c0_61, %c0_62] : memref<128x32xbf16, #tpu.memory_space<vmem>>, vector<128x32xbf16>
    %cst_63 = arith.constant dense<0.000000e+00> : vector<16x32xf32>
    %154 = tpu.matmul %152, %153, %cst_63 {dimension_numbers = #tpu.dot_dimension_numbers<[1], [0], [0], [1], [0, 0, 1, 1], [], []>} : vector<16x128xbf16>, vector<128x32xbf16>, vector<16x32xf32> -> vector<16x32xf32>
    %155 = arith.addf %108, %154 : vector<16x32xf32>
    %c0_64 = arith.constant 0 : index
    %c0_65 = arith.constant 0 : index
    %156 = vector.load %arg17[%c0_64, %c0_65] : memref<1x32xf32, #tpu.memory_space<vmem>>, vector<1x32xf32>
    %157 = vector.broadcast %156 : vector<1x32xf32> to vector<16x32xf32>
    %158 = arith.addf %155, %157 : vector<16x32xf32>
    %c0_66 = arith.constant 0 : index
    %c0_67 = arith.constant 0 : index
    %c0_68 = arith.constant 0 : index
    %159 = vector.load %arg18[%c0_66, %c0_67, %c0_68] : memref<1x16x32xf32, #tpu.memory_space<vmem>>, vector<1x16x32xf32>
    %160 = vector.shape_cast %159 : vector<1x16x32xf32> to vector<16x32xf32>
    %161 = vector.shape_cast %158 : vector<16x32xf32> to vector<1x16x32xf32>
    tpu.vector_store %arg18[%c0_66, %c0_67, %c0_68], %161 {strides = array<i32>} : memref<1x16x32xf32, #tpu.memory_space<vmem>>, vector<1x16x32xf32>,
    return
  }
  func.func @transform_0(%arg0: i32) -> (i32, i32, i32) {
    %c0_i32 = arith.constant 0 : i32
    %c0_i32_0 = arith.constant 0 : i32
    %c0_i32_1 = arith.constant 0 : i32
    return %arg0, %c0_i32, %c0_i32_0 : i32, i32, i32
  }
  func.func @transform_1(%arg0: i32) -> (i32, i32) {
    %c0_i32 = arith.constant 0 : i32
    %c0_i32_0 = arith.constant 0 : i32
    %c0_i32_1 = arith.constant 0 : i32
    return %c0_i32, %c0_i32_0 : i32, i32
  }
  func.func @transform_2(%arg0: i32) -> (i32, i32) {
    %c0_i32 = arith.constant 0 : i32
    %c0_i32_0 = arith.constant 0 : i32
    %c0_i32_1 = arith.constant 0 : i32
    return %c0_i32, %c0_i32_0 : i32, i32
  }
  func.func @transform_3(%arg0: i32) -> (i32, i32) {
    %c0_i32 = arith.constant 0 : i32
    %c0_i32_0 = arith.constant 0 : i32
    %c0_i32_1 = arith.constant 0 : i32
    return %c0_i32, %c0_i32_0 : i32, i32
  }
  func.func @transform_4(%arg0: i32) -> (i32, i32) {
    %c0_i32 = arith.constant 0 : i32
    %c0_i32_0 = arith.constant 0 : i32
    %c0_i32_1 = arith.constant 0 : i32
    return %c0_i32, %c0_i32_0 : i32, i32
  }
  func.func @transform_5(%arg0: i32) -> (i32, i32) {
    %c0_i32 = arith.constant 0 : i32
    %c0_i32_0 = arith.constant 0 : i32
    %c0_i32_1 = arith.constant 0 : i32
    return %c0_i32, %c0_i32_0 : i32, i32
  }
  func.func @transform_6(%arg0: i32) -> (i32, i32) {
    %c0_i32 = arith.constant 0 : i32
    %c0_i32_0 = arith.constant 0 : i32
    %c0_i32_1 = arith.constant 0 : i32
    return %c0_i32, %c0_i32_0 : i32, i32
  }
  func.func @transform_7(%arg0: i32) -> (i32, i32) {
    %c0_i32 = arith.constant 0 : i32
    %c0_i32_0 = arith.constant 0 : i32
    %c0_i32_1 = arith.constant 0 : i32
    return %c0_i32, %c0_i32_0 : i32, i32
  }
  func.func @transform_8(%arg0: i32) -> (i32, i32) {
    %c0_i32 = arith.constant 0 : i32
    %c0_i32_0 = arith.constant 0 : i32
    %c0_i32_1 = arith.constant 0 : i32
    return %c0_i32, %c0_i32_0 : i32, i32
  }
  func.func @transform_9(%arg0: i32) -> (i32, i32) {
    %c0_i32 = arith.constant 0 : i32
    %c0_i32_0 = arith.constant 0 : i32
    %c0_i32_1 = arith.constant 0 : i32
    return %c0_i32, %c0_i32_0 : i32, i32
  }
  func.func @transform_10(%arg0: i32) -> (i32, i32) {
    %c0_i32 = arith.constant 0 : i32
    %c0_i32_0 = arith.constant 0 : i32
    %c0_i32_1 = arith.constant 0 : i32
    return %c0_i32, %c0_i32_0 : i32, i32
  }
  func.func @transform_11(%arg0: i32) -> (i32, i32) {
    %c0_i32 = arith.constant 0 : i32
    %c0_i32_0 = arith.constant 0 : i32
    %c0_i32_1 = arith.constant 0 : i32
    return %c0_i32, %c0_i32_0 : i32, i32
  }
  func.func @transform_12(%arg0: i32) -> (i32, i32) {
    %c0_i32 = arith.constant 0 : i32
    %c0_i32_0 = arith.constant 0 : i32
    %c0_i32_1 = arith.constant 0 : i32
    return %c0_i32, %c0_i32_0 : i32, i32
  }
  func.func @transform_13(%arg0: i32) -> (i32, i32) {
    %c0_i32 = arith.constant 0 : i32
    %c0_i32_0 = arith.constant 0 : i32
    %c0_i32_1 = arith.constant 0 : i32
    return %c0_i32, %c0_i32_0 : i32, i32
  }
  func.func @transform_14(%arg0: i32) -> (i32, i32) {
    %c0_i32 = arith.constant 0 : i32
    %c0_i32_0 = arith.constant 0 : i32
    %c0_i32_1 = arith.constant 0 : i32
    return %c0_i32, %c0_i32_0 : i32, i32
  }
  func.func @transform_15(%arg0: i32) -> (i32, i32) {
    %c0_i32 = arith.constant 0 : i32
    %c0_i32_0 = arith.constant 0 : i32
    %c0_i32_1 = arith.constant 0 : i32
    return %c0_i32, %c0_i32_0 : i32, i32
  }
  func.func @transform_16(%arg0: i32) -> (i32, i32) {
    %c0_i32 = arith.constant 0 : i32
    %c0_i32_0 = arith.constant 0 : i32
    %c0_i32_1 = arith.constant 0 : i32
    return %c0_i32, %c0_i32_0 : i32, i32
  }
  func.func @transform_17(%arg0: i32) -> (i32, i32, i32) {
    %c0_i32 = arith.constant 0 : i32
    %c0_i32_0 = arith.constant 0 : i32
    %c0_i32_1 = arith.constant 0 : i32
    return %arg0, %c0_i32, %c0_i32_0 : i32, i32, i32
  }
}

</mosaic_0001>

<llo_original>
// kernel: tpu_custom_call.1
$region0: #{tpu_custom_call.1}
  #allocation0 [shape = 'u32[]', space=smem, size = 0x4, offset = 0x4, fixed_abs, tag = 'smem constant byte address 0x4 - core index']
  #allocation1 [shape = 'u32[144,128]{1,0:T(1,128)}', space=vmem, size = 0x12000, scoped, tag = 'internal scratch']
  %s0 = inlined_call_operand.vmem [shape: bf16[2,16,80], index: 0, kind: input, shape index: {}]
  %s1 = inlined_call_operand.vmem [shape: bf16[80,32], index: 1, kind: input, shape index: {}]
  %s2 = inlined_call_operand.vmem [shape: f32[1,32], index: 2, kind: input, shape index: {}]
  %s3 = inlined_call_operand.vmem [shape: f32[1,32], index: 3, kind: input, shape index: {}]
  %s4 = inlined_call_operand.vmem [shape: f32[1,32], index: 4, kind: input, shape index: {}]
  %s5 = inlined_call_operand.vmem [shape: f32[1,32], index: 5, kind: input, shape index: {}]
  %s6 = inlined_call_operand.vmem [shape: f32[1,32], index: 6, kind: input, shape index: {}]
  %s7 = inlined_call_operand.vmem [shape: bf16[32,96], index: 7, kind: input, shape index: {}]
  %s8 = inlined_call_operand.vmem [shape: f32[1,96], index: 8, kind: input, shape index: {}]
  %s9 = inlined_call_operand.vmem [shape: bf16[32,32], index: 9, kind: input, shape index: {}]
  %s10 = inlined_call_operand.vmem [shape: f32[1,32], index: 10, kind: input, shape index: {}]
  %s11 = inlined_call_operand.vmem [shape: f32[1,32], index: 11, kind: input, shape index: {}]
  %s12 = inlined_call_operand.vmem [shape: f32[1,32], index: 12, kind: input, shape index: {}]
  %s13 = inlined_call_operand.vmem [shape: bf16[32,128], index: 13, kind: input, shape index: {}]
  %s14 = inlined_call_operand.vmem [shape: f32[1,128], index: 14, kind: input, shape index: {}]
  %s15 = inlined_call_operand.vmem [shape: bf16[128,32], index: 15, kind: input, shape index: {}]
  %s16 = inlined_call_operand.vmem [shape: f32[1,32], index: 16, kind: input, shape index: {}]
  %s17 = inlined_call_operand.hbm [shape: f32[2,16,32], index: 17, kind: output, shape index: {}]
  %s18 = sld [smem:[#allocation0]]
  $region101: #{tpu_custom_call.1} parent=0
    _
  %s20 = ssub.s32 1, %s18
  %s21 = scalar_select 0, %s20, %s18
  $region1: #{tpu_custom_call.1} parent=0
    #allocation2 [shape = 'u8[16384]{0}', space=vmem, size = 0x4000, scoped, tag = 'output window, operand 0']
    #allocation3 [shape = 's32[2]{0}', space=sflag, size = 0x8, scoped, tag = 'scoped memory for tpu_custom_call.1']
    %22 = vsyncpa [#allocation3], 0
    %s23 = scalar_lea.sflag [#allocation3], 1
    %24 = vsyncpa %s23, 0
    loop: start=0, step=1, limit=4
    $region2: #{tpu_custom_call.1} parent=1 // loop_pre_header
      _
    $region3: #{tpu_custom_call.1} parent=1 // loop_header
      %s26 = sphi 0, %s30
      %p27 = scmp.ge.s32.totalorder %s26, 4
      %s36 = sphi 0, %s38
      %s39 = sphi 0, %s36
      %s40 = sphi 0, %s39
      %s56 = sphi 0, %s40
      %s60 = sphi 0, %s60
      %s62 = sphi 0, %s60
      %s63 = sphi 0, %s62
      %s77 = sphi 0, %s63
      %s81 = sphi 0, %s81
      %s83 = sphi 0, %s81
      %s84 = sphi 0, %s83
      %s98 = sphi 0, %s84
      %s102 = sphi 0, %s102
      %s104 = sphi 0, %s102
      %s105 = sphi 0, %s104
      %s119 = sphi 0, %s105
      %s123 = sphi 0, %s123
      %s125 = sphi 0, %s123
      %s126 = sphi 0, %s125
      %s140 = sphi 0, %s126
      %s144 = sphi 0, %s144
      %s146 = sphi 0, %s144
      %s147 = sphi 0, %s146
      %s161 = sphi 0, %s147
      %s165 = sphi 0, %s165
      %s167 = sphi 0, %s165
      %s168 = sphi 0, %s167
      %s182 = sphi 0, %s168
      %s186 = sphi 0, %s186
      %s188 = sphi 0, %s186
      %s189 = sphi 0, %s188
      %s203 = sphi 0, %s189
      %s207 = sphi 0, %s207
      %s209 = sphi 0, %s207
      %s210 = sphi 0, %s209
      %s224 = sphi 0, %s210
      %s228 = sphi 0, %s228
      %s230 = sphi 0, %s228
      %s231 = sphi 0, %s230
      %s245 = sphi 0, %s231
      %s249 = sphi 0, %s249
      %s251 = sphi 0, %s249
      %s252 = sphi 0, %s251
      %s266 = sphi 0, %s252
      %s270 = sphi 0, %s270
      %s272 = sphi 0, %s270
      %s273 = sphi 0, %s272
      %s287 = sphi 0, %s273
      %s291 = sphi 0, %s291
      %s293 = sphi 0, %s291
      %s294 = sphi 0, %s293
      %s308 = sphi 0, %s294
      %s312 = sphi 0, %s312
      %s314 = sphi 0, %s312
      %s315 = sphi 0, %s314
      %s329 = sphi 0, %s315
      %s333 = sphi 0, %s333
      %s335 = sphi 0, %s333
      %s336 = sphi 0, %s335
      %s350 = sphi 0, %s336
      %s354 = sphi 0, %s354
      %s356 = sphi 0, %s354
      %s357 = sphi 0, %s356
      %s371 = sphi 0, %s357
      %s375 = sphi 0, %s375
      %s377 = sphi 0, %s375
      %s378 = sphi 0, %s377
      %s392 = sphi 0, %s378
      %s398 = sphi 0, %s400
      %s401 = sphi 0, %s398
      %s402 = sphi 0, %s401
      %s418 = sphi 0, %s402
    $region4: #{tpu_custom_call.1} parent=1 // loop_header_branch
      %29 = sbr.rel (%p27) target = $region8
    $region5: #{tpu_custom_call.1} parent=1 // loop_body
      %s31 = ssub.s32 %s26, 1
      %s32 = ssub.s32 %s26, 2
      %s33 = sadd.s32 %s26, 1
      %s34 = ssub.s32 %s26, %s33
      %p35 = scmp.eq.s32.totalorder %s34, 0
      %s37 = sadd.s32 %s36, 1
      %s38 = scalar_select %p35, %s36, %s37
      %p41 = pneg %p35
      %p42 = scmp.eq.s32.totalorder %s26, 1
      %p43 = por %p41, %p42
      %p44 = scmp.ne.s32.totalorder %s36, %s39
      %p45 = scmp.eq.s32.totalorder %s26, 0
      %p46 = por %p44, %p45
      %p47 = scmp.ne.s32.totalorder %s36, %s39
      %p48 = scmp.eq.s32.totalorder %s31, 1
      %p49 = por %p47, %p48
      %p50 = scmp.ne.s32.totalorder %s39, %s40
      %p51 = scmp.eq.s32.totalorder %s31, 0
      %p52 = por %p50, %p51
      %p53 = scmp.ne.s32.totalorder %s39, %s40
      %p54 = scmp.eq.s32.totalorder %s32, 1
      %p55 = por %p53, %p54
      %p57 = scmp.ne.s32.totalorder %s40, %s56
      %p58 = scmp.eq.s32.totalorder %s32, 0
      %p59 = por %p57, %p58
      %s61 = sadd.s32 %s60, 1
      %p64 = scmp.eq.s32.totalorder %s26, 1
      %p65 = scmp.ne.s32.totalorder %s60, %s62
      %p66 = scmp.eq.s32.totalorder %s26, 0
      %p67 = por %p65, %p66
      %p68 = scmp.ne.s32.totalorder %s60, %s62
      %p69 = scmp.eq.s32.totalorder %s31, 1
      %p70 = por %p68, %p69
      %p71 = scmp.ne.s32.totalorder %s62, %s63
      %p72 = scmp.eq.s32.totalorder %s31, 0
      %p73 = por %p71, %p72
      %p74 = scmp.ne.s32.totalorder %s62, %s63
      %p75 = scmp.eq.s32.totalorder %s32, 1
      %p76 = por %p74, %p75
      %p78 = scmp.ne.s32.totalorder %s63, %s77
      %p79 = scmp.eq.s32.totalorder %s32, 0
      %p80 = por %p78, %p79
      %s82 = sadd.s32 %s81, 1
      %p85 = scmp.eq.s32.totalorder %s26, 1
      %p86 = scmp.ne.s32.totalorder %s81, %s83
      %p87 = scmp.eq.s32.totalorder %s26, 0
      %p88 = por %p86, %p87
      %p89 = scmp.ne.s32.totalorder %s81, %s83
      %p90 = scmp.eq.s32.totalorder %s31, 1
      %p91 = por %p89, %p90
      %p92 = scmp.ne.s32.totalorder %s83, %s84
      %p93 = scmp.eq.s32.totalorder %s31, 0
      %p94 = por %p92, %p93
      %p95 = scmp.ne.s32.totalorder %s83, %s84
      %p96 = scmp.eq.s32.totalorder %s32, 1
      %p97 = por %p95, %p96
      %p99 = scmp.ne.s32.totalorder %s84, %s98
      %p100 = scmp.eq.s32.totalorder %s32, 0
      %p101 = por %p99, %p100
      %s103 = sadd.s32 %s102, 1
      %p106 = scmp.eq.s32.totalorder %s26, 1
      %p107 = scmp.ne.s32.totalorder %s102, %s104
      %p108 = scmp.eq.s32.totalorder %s26, 0
      %p109 = por %p107, %p108
      %p110 = scmp.ne.s32.totalorder %s102, %s104
      %p111 = scmp.eq.s32.totalorder %s31, 1
      %p112 = por %p110, %p111
      %p113 = scmp.ne.s32.totalorder %s104, %s105
      %p114 = scmp.eq.s32.totalorder %s31, 0
      %p115 = por %p113, %p114
      %p116 = scmp.ne.s32.totalorder %s104, %s105
      %p117 = scmp.eq.s32.totalorder %s32, 1
      %p118 = por %p116, %p117
      %p120 = scmp.ne.s32.totalorder %s105, %s119
      %p121 = scmp.eq.s32.totalorder %s32, 0
      %p122 = por %p120, %p121
      %s124 = sadd.s32 %s123, 1
      %p127 = scmp.eq.s32.totalorder %s26, 1
      %p128 = scmp.ne.s32.totalorder %s123, %s125
      %p129 = scmp.eq.s32.totalorder %s26, 0
      %p130 = por %p128, %p129
      %p131 = scmp.ne.s32.totalorder %s123, %s125
      %p132 = scmp.eq.s32.totalorder %s31, 1
      %p133 = por %p131, %p132
      %p134 = scmp.ne.s32.totalorder %s125, %s126
      %p135 = scmp.eq.s32.totalorder %s31, 0
      %p136 = por %p134, %p135
      %p137 = scmp.ne.s32.totalorder %s125, %s126
      %p138 = scmp.eq.s32.totalorder %s32, 1
      %p139 = por %p137, %p138
      %p141 = scmp.ne.s32.totalorder %s126, %s140
      %p142 = scmp.eq.s32.totalorder %s32, 0
      %p143 = por %p141, %p142
      %s145 = sadd.s32 %s144, 1
      %p148 = scmp.eq.s32.totalorder %s26, 1
      %p149 = scmp.ne.s32.totalorder %s144, %s146
      %p150 = scmp.eq.s32.totalorder %s26, 0
      %p151 = por %p149, %p150
      %p152 = scmp.ne.s32.totalorder %s144, %s146
      %p153 = scmp.eq.s32.totalorder %s31, 1
      %p154 = por %p152, %p153
      %p155 = scmp.ne.s32.totalorder %s146, %s147
      %p156 = scmp.eq.s32.totalorder %s31, 0
      %p157 = por %p155, %p156
      %p158 = scmp.ne.s32.totalorder %s146, %s147
      %p159 = scmp.eq.s32.totalorder %s32, 1
      %p160 = por %p158, %p159
      %p162 = scmp.ne.s32.totalorder %s147, %s161
      %p163 = scmp.eq.s32.totalorder %s32, 0
      %p164 = por %p162, %p163
      %s166 = sadd.s32 %s165, 1
      %p169 = scmp.eq.s32.totalorder %s26, 1
      %p170 = scmp.ne.s32.totalorder %s165, %s167
      %p171 = scmp.eq.s32.totalorder %s26, 0
      %p172 = por %p170, %p171
      %p173 = scmp.ne.s32.totalorder %s165, %s167
      %p174 = scmp.eq.s32.totalorder %s31, 1
      %p175 = por %p173, %p174
      %p176 = scmp.ne.s32.totalorder %s167, %s168
      %p177 = scmp.eq.s32.totalorder %s31, 0
      %p178 = por %p176, %p177
      %p179 = scmp.ne.s32.totalorder %s167, %s168
      %p180 = scmp.eq.s32.totalorder %s32, 1
      %p181 = por %p179, %p180
      %p183 = scmp.ne.s32.totalorder %s168, %s182
      %p184 = scmp.eq.s32.totalorder %s32, 0
      %p185 = por %p183, %p184
      %s187 = sadd.s32 %s186, 1
      %p190 = scmp.eq.s32.totalorder %s26, 1
      %p191 = scmp.ne.s32.totalorder %s186, %s188
      %p192 = scmp.eq.s32.totalorder %s26, 0
      %p193 = por %p191, %p192
      %p194 = scmp.ne.s32.totalorder %s186, %s188
      %p195 = scmp.eq.s32.totalorder %s31, 1
      %p196 = por %p194, %p195
      %p197 = scmp.ne.s32.totalorder %s188, %s189
      %p198 = scmp.eq.s32.totalorder %s31, 0
      %p199 = por %p197, %p198
      %p200 = scmp.ne.s32.totalorder %s188, %s189
      %p201 = scmp.eq.s32.totalorder %s32, 1
      %p202 = por %p200, %p201
      %p204 = scmp.ne.s32.totalorder %s189, %s203
      %p205 = scmp.eq.s32.totalorder %s32, 0
      %p206 = por %p204, %p205
      %s208 = sadd.s32 %s207, 1
      %p211 = scmp.eq.s32.totalorder %s26, 1
      %p212 = scmp.ne.s32.totalorder %s207, %s209
      %p213 = scmp.eq.s32.totalorder %s26, 0
      %p214 = por %p212, %p213
      %p215 = scmp.ne.s32.totalorder %s207, %s209
      %p216 = scmp.eq.s32.totalorder %s31, 1
      %p217 = por %p215, %p216
      %p218 = scmp.ne.s32.totalorder %s209, %s210
      %p219 = scmp.eq.s32.totalorder %s31, 0
      %p220 = por %p218, %p219
      %p221 = scmp.ne.s32.totalorder %s209, %s210
      %p222 = scmp.eq.s32.totalorder %s32, 1
      %p223 = por %p221, %p222
      %p225 = scmp.ne.s32.totalorder %s210, %s224
      %p226 = scmp.eq.s32.totalorder %s32, 0
      %p227 = por %p225, %p226
      %s229 = sadd.s32 %s228, 1
      %p232 = scmp.eq.s32.totalorder %s26, 1
      %p233 = scmp.ne.s32.totalorder %s228, %s230
      %p234 = scmp.eq.s32.totalorder %s26, 0
      %p235 = por %p233, %p234
      %p236 = scmp.ne.s32.totalorder %s228, %s230
      %p237 = scmp.eq.s32.totalorder %s31, 1
      %p238 = por %p236, %p237
      %p239 = scmp.ne.s32.totalorder %s230, %s231
      %p240 = scmp.eq.s32.totalorder %s31, 0
      %p241 = por %p239, %p240
      %p242 = scmp.ne.s32.totalorder %s230, %s231
      %p243 = scmp.eq.s32.totalorder %s32, 1
      %p244 = por %p242, %p243
      %p246 = scmp.ne.s32.totalorder %s231, %s245
      %p247 = scmp.eq.s32.totalorder %s32, 0
      %p248 = por %p246, %p247
      %s250 = sadd.s32 %s249, 1
      %p253 = scmp.eq.s32.totalorder %s26, 1
      %p254 = scmp.ne.s32.totalorder %s249, %s251
      %p255 = scmp.eq.s32.totalorder %s26, 0
      %p256 = por %p254, %p255
      %p257 = scmp.ne.s32.totalorder %s249, %s251
      %p258 = scmp.eq.s32.totalorder %s31, 1
      %p259 = por %p257, %p258
      %p260 = scmp.ne.s32.totalorder %s251, %s252
      %p261 = scmp.eq.s32.totalorder %s31, 0
      %p262 = por %p260, %p261
      %p263 = scmp.ne.s32.totalorder %s251, %s252
      %p264 = scmp.eq.s32.totalorder %s32, 1
      %p265 = por %p263, %p264
      %p267 = scmp.ne.s32.totalorder %s252, %s266
      %p268 = scmp.eq.s32.totalorder %s32, 0
      %p269 = por %p267, %p268
      %s271 = sadd.s32 %s270, 1
      %p274 = scmp.eq.s32.totalorder %s26, 1
      %p275 = scmp.ne.s32.totalorder %s270, %s272
      %p276 = scmp.eq.s32.totalorder %s26, 0
      %p277 = por %p275, %p276
      %p278 = scmp.ne.s32.totalorder %s270, %s272
      %p279 = scmp.eq.s32.totalorder %s31, 1
      %p280 = por %p278, %p279
      %p281 = scmp.ne.s32.totalorder %s272, %s273
      %p282 = scmp.eq.s32.totalorder %s31, 0
      %p283 = por %p281, %p282
      %p284 = scmp.ne.s32.totalorder %s272, %s273
      %p285 = scmp.eq.s32.totalorder %s32, 1
      %p286 = por %p284, %p285
      %p288 = scmp.ne.s32.totalorder %s273, %s287
      %p289 = scmp.eq.s32.totalorder %s32, 0
      %p290 = por %p288, %p289
      %s292 = sadd.s32 %s291, 1
      %p295 = scmp.eq.s32.totalorder %s26, 1
      %p296 = scmp.ne.s32.totalorder %s291, %s293
      %p297 = scmp.eq.s32.totalorder %s26, 0
      %p298 = por %p296, %p297
      %p299 = scmp.ne.s32.totalorder %s291, %s293
      %p300 = scmp.eq.s32.totalorder %s31, 1
      %p301 = por %p299, %p300
      %p302 = scmp.ne.s32.totalorder %s293, %s294
      %p303 = scmp.eq.s32.totalorder %s31, 0
      %p304 = por %p302, %p303
      %p305 = scmp.ne.s32.totalorder %s293, %s294
      %p306 = scmp.eq.s32.totalorder %s32, 1
      %p307 = por %p305, %p306
      %p309 = scmp.ne.s32.totalorder %s294, %s308
      %p310 = scmp.eq.s32.totalorder %s32, 0
      %p311 = por %p309, %p310
      %s313 = sadd.s32 %s312, 1
      %p316 = scmp.eq.s32.totalorder %s26, 1
      %p317 = scmp.ne.s32.totalorder %s312, %s314
      %p318 = scmp.eq.s32.totalorder %s26, 0
      %p319 = por %p317, %p318
      %p320 = scmp.ne.s32.totalorder %s312, %s314
      %p321 = scmp.eq.s32.totalorder %s31, 1
      %p322 = por %p320, %p321
      %p323 = scmp.ne.s32.totalorder %s314, %s315
      %p324 = scmp.eq.s32.totalorder %s31, 0
      %p325 = por %p323, %p324
      %p326 = scmp.ne.s32.totalorder %s314, %s315
      %p327 = scmp.eq.s32.totalorder %s32, 1
      %p328 = por %p326, %p327
      %p330 = scmp.ne.s32.totalorder %s315, %s329
      %p331 = scmp.eq.s32.totalorder %s32, 0
      %p332 = por %p330, %p331
      %s334 = sadd.s32 %s333, 1
      %p337 = scmp.eq.s32.totalorder %s26, 1
      %p338 = scmp.ne.s32.totalorder %s333, %s335
      %p339 = scmp.eq.s32.totalorder %s26, 0
      %p340 = por %p338, %p339
      %p341 = scmp.ne.s32.totalorder %s333, %s335
      %p342 = scmp.eq.s32.totalorder %s31, 1
      %p343 = por %p341, %p342
      %p344 = scmp.ne.s32.totalorder %s335, %s336
      %p345 = scmp.eq.s32.totalorder %s31, 0
      %p346 = por %p344, %p345
      %p347 = scmp.ne.s32.totalorder %s335, %s336
      %p348 = scmp.eq.s32.totalorder %s32, 1
      %p349 = por %p347, %p348
      %p351 = scmp.ne.s32.totalorder %s336, %s350
      %p352 = scmp.eq.s32.totalorder %s32, 0
      %p353 = por %p351, %p352
      %s355 = sadd.s32 %s354, 1
      %p358 = scmp.eq.s32.totalorder %s26, 1
      %p359 = scmp.ne.s32.totalorder %s354, %s356
      %p360 = scmp.eq.s32.totalorder %s26, 0
      %p361 = por %p359, %p360
      %p362 = scmp.ne.s32.totalorder %s354, %s356
      %p363 = scmp.eq.s32.totalorder %s31, 1
      %p364 = por %p362, %p363
      %p365 = scmp.ne.s32.totalorder %s356, %s357
      %p366 = scmp.eq.s32.totalorder %s31, 0
      %p367 = por %p365, %p366
      %p368 = scmp.ne.s32.totalorder %s356, %s357
      %p369 = scmp.eq.s32.totalorder %s32, 1
      %p370 = por %p368, %p369
      %p372 = scmp.ne.s32.totalorder %s357, %s371
      %p373 = scmp.eq.s32.totalorder %s32, 0
      %p374 = por %p372, %p373
      %s376 = sadd.s32 %s375, 1
      %p379 = scmp.eq.s32.totalorder %s26, 1
      %p380 = scmp.ne.s32.totalorder %s375, %s377
      %p381 = scmp.eq.s32.totalorder %s26, 0
      %p382 = por %p380, %p381
      %p383 = scmp.ne.s32.totalorder %s375, %s377
      %p384 = scmp.eq.s32.totalorder %s31, 1
      %p385 = por %p383, %p384
      %p386 = scmp.ne.s32.totalorder %s377, %s378
      %p387 = scmp.eq.s32.totalorder %s31, 0
      %p388 = por %p386, %p387
      %p389 = scmp.ne.s32.totalorder %s377, %s378
      %p390 = scmp.eq.s32.totalorder %s32, 1
      %p391 = por %p389, %p390
      %p393 = scmp.ne.s32.totalorder %s378, %s392
      %p394 = scmp.eq.s32.totalorder %s32, 0
      %p395 = por %p393, %p394
      %s396 = ssub.s32 %s26, %s33
      %p397 = scmp.eq.s32.totalorder %s396, 0
      %s399 = sadd.s32 %s398, 1
      %s400 = scalar_select %p397, %s398, %s399
      %p403 = pneg %p397
      %p404 = scmp.eq.s32.totalorder %s26, 1
      %p405 = por %p403, %p404
      %p406 = scmp.ne.s32.totalorder %s398, %s401
      %p407 = scmp.eq.s32.totalorder %s26, 0
      %p408 = por %p406, %p407
      %p409 = scmp.ne.s32.totalorder %s398, %s401
      %p410 = scmp.eq.s32.totalorder %s31, 1
      %p411 = por %p409, %p410
      %p412 = scmp.ne.s32.totalorder %s401, %s402
      %p413 = scmp.eq.s32.totalorder %s31, 0
      %p414 = por %p412, %p413
      %p415 = scmp.ne.s32.totalorder %s401, %s402
      %p416 = scmp.eq.s32.totalorder %s32, 1
      %p417 = por %p415, %p416
      %p419 = scmp.ne.s32.totalorder %s402, %s418
      %p420 = scmp.eq.s32.totalorder %s32, 0
      %p421 = por %p419, %p420
      %p422 = scmp.le.s32.totalorder 1, %s26
      %p423 = scmp.lt.s32.totalorder %s26, 3
      %p424 = pnand %p422, %p423
      %p425 = pneg %p424
      // Predicated region
      $region9: #{tpu_custom_call.1} parent=5 // pred_check
        _
      $region10: #{tpu_custom_call.1} parent=5 // pred_check_branch
        %427 = sbr.rel (%p424) target = $region12
      $region11: #{tpu_custom_call.1} parent=5 // pred_region
        %s428 = ssub.s32 %s26, 1
        // Predicated region
        $region13: #{tpu_custom_call.1} parent=11 // pred_check
          %p429 = pneg %p73
        $region14: #{tpu_custom_call.1} parent=11 // pred_check_branch
          %431 = sbr.rel (%p429) target = $region16
        $region15: #{tpu_custom_call.1} parent=11 // pred_region
          _
        $region16: #{tpu_custom_call.1} parent=11 // pred_fallthru
          _
        // Predicated region
        $region17: #{tpu_custom_call.1} parent=11 // pred_check
          %p432 = pneg %p94
        $region18: #{tpu_custom_call.1} parent=11 // pred_check_branch
          %434 = sbr.rel (%p432) target = $region20
        $region19: #{tpu_custom_call.1} parent=11 // pred_region
          _
        $region20: #{tpu_custom_call.1} parent=11 // pred_fallthru
          _
        // Predicated region
        $region21: #{tpu_custom_call.1} parent=11 // pred_check
          %p435 = pneg %p115
        $region22: #{tpu_custom_call.1} parent=11 // pred_check_branch
          %437 = sbr.rel (%p435) target = $region24
        $region23: #{tpu_custom_call.1} parent=11 // pred_region
          _
        $region24: #{tpu_custom_call.1} parent=11 // pred_fallthru
          _
        // Predicated region
        $region25: #{tpu_custom_call.1} parent=11 // pred_check
          %p438 = pneg %p136
        $region26: #{tpu_custom_call.1} parent=11 // pred_check_branch
          %440 = sbr.rel (%p438) target = $region28
        $region27: #{tpu_custom_call.1} parent=11 // pred_region
          _
        $region28: #{tpu_custom_call.1} parent=11 // pred_fallthru
          _
        // Predicated region
        $region29: #{tpu_custom_call.1} parent=11 // pred_check
          %p441 = pneg %p157
        $region30: #{tpu_custom_call.1} parent=11 // pred_check_branch
          %443 = sbr.rel (%p441) target = $region32
        $region31: #{tpu_custom_call.1} parent=11 // pred_region
          _
        $region32: #{tpu_custom_call.1} parent=11 // pred_fallthru
          _
        // Predicated region
        $region33: #{tpu_custom_call.1} parent=11 // pred_check
          %p444 = pneg %p178
        $region34: #{tpu_custom_call.1} parent=11 // pred_check_branch
          %446 = sbr.rel (%p444) target = $region36
        $region35: #{tpu_custom_call.1} parent=11 // pred_region
          _
        $region36: #{tpu_custom_call.1} parent=11 // pred_fallthru
          _
        // Predicated region
        $region37: #{tpu_custom_call.1} parent=11 // pred_check
          %p447 = pneg %p199
        $region38: #{tpu_custom_call.1} parent=11 // pred_check_branch
          %449 = sbr.rel (%p447) target = $region40
        $region39: #{tpu_custom_call.1} parent=11 // pred_region
          _
        $region40: #{tpu_custom_call.1} parent=11 // pred_fallthru
          _
        // Predicated region
        $region41: #{tpu_custom_call.1} parent=11 // pred_check
          %p450 = pneg %p220
        $region42: #{tpu_custom_call.1} parent=11 // pred_check_branch
          %452 = sbr.rel (%p450) target = $region44
        $region43: #{tpu_custom_call.1} parent=11 // pred_region
          _
        $region44: #{tpu_custom_call.1} parent=11 // pred_fallthru
          _
        // Predicated region
        $region45: #{tpu_custom_call.1} parent=11 // pred_check
          %p453 = pneg %p241
        $region46: #{tpu_custom_call.1} parent=11 // pred_check_branch
          %455 = sbr.rel (%p453) target = $region48
        $region47: #{tpu_custom_call.1} parent=11 // pred_region
          _
        $region48: #{tpu_custom_call.1} parent=11 // pred_fallthru
          _
        // Predicated region
        $region49: #{tpu_custom_call.1} parent=11 // pred_check
          %p456 = pneg %p262
        $region50: #{tpu_custom_call.1} parent=11 // pred_check_branch
          %458 = sbr.rel (%p456) target = $region52
        $region51: #{tpu_custom_call.1} parent=11 // pred_region
          _
        $region52: #{tpu_custom_call.1} parent=11 // pred_fallthru
          _
        // Predicated region
        $region53: #{tpu_custom_call.1} parent=11 // pred_check
          %p459 = pneg %p283
        $region54: #{tpu_custom_call.1} parent=11 // pred_check_branch
          %461 = sbr.rel (%p459) target = $region56
        $region55: #{tpu_custom_call.1} parent=11 // pred_region
          _
        $region56: #{tpu_custom_call.1} parent=11 // pred_fallthru
          _
        // Predicated region
        $region57: #{tpu_custom_call.1} parent=11 // pred_check
          %p462 = pneg %p304
        $region58: #{tpu_custom_call.1} parent=11 // pred_check_branch
          %464 = sbr.rel (%p462) target = $region60
        $region59: #{tpu_custom_call.1} parent=11 // pred_region
          _
        $region60: #{tpu_custom_call.1} parent=11 // pred_fallthru
          _
        // Predicated region
        $region61: #{tpu_custom_call.1} parent=11 // pred_check
          %p465 = pneg %p325
        $region62: #{tpu_custom_call.1} parent=11 // pred_check_branch
          %467 = sbr.rel (%p465) target = $region64
        $region63: #{tpu_custom_call.1} parent=11 // pred_region
          _
        $region64: #{tpu_custom_call.1} parent=11 // pred_fallthru
          _
        // Predicated region
        $region65: #{tpu_custom_call.1} parent=11 // pred_check
          %p468 = pneg %p346
        $region66: #{tpu_custom_call.1} parent=11 // pred_check_branch
          %470 = sbr.rel (%p468) target = $region68
        $region67: #{tpu_custom_call.1} parent=11 // pred_region
          _
        $region68: #{tpu_custom_call.1} parent=11 // pred_fallthru
          _
        // Predicated region
        $region69: #{tpu_custom_call.1} parent=11 // pred_check
          %p471 = pneg %p367
        $region70: #{tpu_custom_call.1} parent=11 // pred_check_branch
          %473 = sbr.rel (%p471) target = $region72
        $region71: #{tpu_custom_call.1} parent=11 // pred_region
          _
        $region72: #{tpu_custom_call.1} parent=11 // pred_fallthru
          _
        // Predicated region
        $region73: #{tpu_custom_call.1} parent=11 // pred_check
          %p474 = pneg %p388
        $region74: #{tpu_custom_call.1} parent=11 // pred_check_branch
          %476 = sbr.rel (%p474) target = $region76
        $region75: #{tpu_custom_call.1} parent=11 // pred_region
          _
        $region76: #{tpu_custom_call.1} parent=11 // pred_fallthru
          _
      $region12: #{tpu_custom_call.1} parent=5 // pred_fallthru
        _
      %p477 = scmp.lt.s32.totalorder %s26, 2
      // Predicated region
      $region77: #{tpu_custom_call.1} parent=5 // pred_check
        %p478 = pneg %p477
      $region78: #{tpu_custom_call.1} parent=5 // pred_check_branch
        %480 = sbr.rel (%p478) target = $region80
      $region79: #{tpu_custom_call.1} parent=5 // pred_region
        // Predicated region
        $region81: #{tpu_custom_call.1} parent=79 // pred_check
          %p481 = pneg %p46
        $region82: #{tpu_custom_call.1} parent=79 // pred_check_branch
          %483 = sbr.rel (%p481) target = $region84
        $region83: #{tpu_custom_call.1} parent=79 // pred_region
          %p484 = scmp.lt.s32.totalorder %s26, 1
          %s485 = scalar_select %p484, %s26, 1
          %s486 = smul.addr %s485, 2
          %s487 = smul.addr %s486, 4
          %s488 = scalar_lea.vmem %s0, %s487
        $region84: #{tpu_custom_call.1} parent=79 // pred_fallthru
          _
      $region80: #{tpu_custom_call.1} parent=5 // pred_fallthru
        _
      %p489 = scmp.le.s32.totalorder 1, %s26
      %p490 = scmp.lt.s32.totalorder %s26, 3
      %p491 = pnand %p489, %p490
      %p492 = pneg %p491
      // Predicated region
      $region85: #{tpu_custom_call.1} parent=5 // pred_check
        _
      $region86: #{tpu_custom_call.1} parent=5 // pred_check_branch
        %494 = sbr.rel (%p491) target = $region88
      $region87: #{tpu_custom_call.1} parent=5 // pred_region
        %s495 = ssub.s32 %s26, 1
        %p496 = scmp.lt.s32.totalorder %s31, 1
        %s497 = scalar_select %p496, %s31, 1
        %s498 = smul.addr %s497, 2
        %s499 = smul.addr %s498, 4
        %s500 = scalar_lea.vmem %s0, %s499
        %p501 = pneg %p52
        %p502 = pneg %p49
        %p503 = pneg %p73
        %p504 = pneg %p70
        %p505 = pneg %p94
        %p506 = pneg %p91
        %p507 = pneg %p115
        %p508 = pneg %p112
        %p509 = pneg %p136
        %p510 = pneg %p133
        %p511 = pneg %p157
        %p512 = pneg %p154
        %p513 = pneg %p178
        %p514 = pneg %p175
        %p515 = pneg %p199
        %p516 = pneg %p196
        %p517 = pneg %p220
        %p518 = pneg %p217
        %p519 = pneg %p241
        %p520 = pneg %p238
        %p521 = pneg %p262
        %p522 = pneg %p259
        %p523 = pneg %p283
        %p524 = pneg %p280
        %p525 = pneg %p304
        %p526 = pneg %p301
        %p527 = pneg %p325
        %p528 = pneg %p322
        %p529 = pneg %p346
        %p530 = pneg %p343
        %p531 = pneg %p367
        %p532 = pneg %p364
        %p533 = pneg %p388
        %p534 = pneg %p385
        %p535 = pneg %p414
        %p536 = pneg %p411
        %s537 = sand.u32 %s401, 1
        %s538 = scalar_lea.sflag [#allocation3], %s537
        %s539 = sand.u32 %s401, 1
        %s540 = smul.addr %s539, 16
        %s541 = scalar_lea.vmem [#allocation2], %s540
        %p542 = scmp.lt.s32.totalorder %s31, 1
        %s543 = scalar_select %p542, %s31, 1
        %s544 = smul.addr %s543, 2
        %s545 = smul.addr %s544, 4
        %s546 = scalar_lea.vmem %s0, %s545
        %v548 = vld [vmem:[%s546] sm:$0xf]
        %v549 = vld [vmem:[%s546 + $0x4] sm:$0xf]
        %v550 = vld [vmem:[%s1] sm:$0xf]
        %v551 = vld [vmem:[%s1 + $0x4] sm:$0xf]
        %v552 = vld [vmem:[%s1 + $0x8] sm:$0xf]
        %v553 = vld [vmem:[%s1 + $0xc] sm:$0xf]
        %v554 = vld [vmem:[%s1 + $0x10] sm:$0xf]
        %v555 = vld [vmem:[%s1 + $0x14] sm:$0xf]
        %v556 = vld [vmem:[%s1 + $0x18] sm:$0xf]
        %v557 = vld [vmem:[%s1 + $0x1c] sm:$0xf]
        %v558 = vld [vmem:[%s1 + $0x20] sm:$0xf]
        %v559 = vld [vmem:[%s1 + $0x24] sm:$0xf]
        %v560 = vld [vmem:[%s2] sm:$0x1]
        %v562 = vlaneseq
        %v563 = vshrl.u32 %v562, 7
        %v564 = vsub.s32 0, %v563
        %v565 = vrot.slane %v560, %v564
        %v569 = vunpack.c.l.b16 %v548
        %v570 = vunpack.c.l.b16 %v549
        %v571 = vpack.c.b16 %v570, %v569
        %v582 = vunpack.c.l.b16 %v550
        %v583 = vunpack.c.l.b16 %v551
        %v584 = vunpack.c.l.b16 %v552
        %v585 = vunpack.c.l.b16 %v553
        %v586 = vunpack.c.l.b16 %v554
        %v587 = vunpack.c.l.b16 %v555
        %v588 = vunpack.c.l.b16 %v556
        %v589 = vunpack.c.l.b16 %v557
        %v590 = vunpack.c.l.b16 %v558
        %v591 = vunpack.c.l.b16 %v559
        %v592 = vpack.c.b16 %v583, %v582
        %v593 = vpack.c.b16 %v585, %v584
        %v594 = vpack.c.b16 %v587, %v586
        %v595 = vpack.c.b16 %v589, %v588
        %v596 = vpack.c.b16 %v591, %v590
        %vm602 = vcmask 654336
        %v604 = vsel %vm602, %v571, 0
        %606 = vmatprep.subr.bf16.mxu0 0
        %607 = vmatpush1.bf16.msra.mxu0 %v592
        %608 = vmatprep.subr.bf16.mxu0 0
        %609 = vmatpush1.bf16.msra.mxu0 %v593
        %610 = vmatprep.subr.bf16.mxu0 0
        %611 = vmatpush1.bf16.msra.mxu0 %v594
        %612 = vmatprep.subr.bf16.mxu0 0
        %613 = vmatpush1.bf16.msra.mxu0 %v595
        %614 = vmatprep.subr.bf16.mxu0 0
        %615 = vmatpush1.bf16.msra.mxu0 %v596
        %616 = vmatprep.subr.bf16.mxu0 0
        %617 = vmatpush1.bf16.msra.mxu0 0
        %618 = vmatprep.subr.bf16.mxu0 0
        %619 = vmatpush1.bf16.msra.mxu0 0
        %620 = vmatprep.subr.bf16.mxu0 0
        %621 = vmatpush1.bf16.msra.mxu0 0
        %622 = vmatprep.subr.bf16.mxu0 0
        %623 = vmatpush1.bf16.msra.mxu0 0
        %624 = vmatprep.subr.bf16.mxu0 0
        %625 = vmatpush1.bf16.msra.mxu0 0
        %626 = vmatprep.subr.bf16.mxu0 0
        %627 = vmatpush1.bf16.msra.mxu0 0
        %628 = vmatprep.subr.bf16.mxu0 0
        %629 = vmatpush1.bf16.msra.mxu0 0
        %630 = vmatprep.subr.bf16.mxu0 0
        %631 = vmatpush1.bf16.msra.mxu0 0
        %632 = vmatprep.subr.bf16.mxu0 0
        %633 = vmatpush1.bf16.msra.mxu0 0
        %634 = vmatprep.subr.bf16.mxu0 0
        %635 = vmatpush1.bf16.msra.mxu0 0
        %636 = vmatprep.subr.bf16.mxu0 0
        %637 = vmatpush1.bf16.msra.mxu0 0
        %638 = vmatprep.mubr.bf16.mxu0 0
        %639 = vmatmul.mubr.bf16.gmra.mrb[0].mxu0 %v604
        %v640 = vpop.f32.mrb[0].mxu0
        %v641 = vadd.f32 %v565, %v640
        %v642 = vpop.f32.mrb[0].mxu0
        %v643 = vpop.f32.mrb[0].mxu0
        %v644 = vadd.f32 %v565, %v643
        %v645 = vpop.f32.mrb[0].mxu0
        %646 = vdwg.mxu0
        %v647 = vld [vmem:[%s3] sm:$0x1]
        %v648 = vld [vmem:[%s4] sm:$0x1]
        %vm649 = vcmask 261120
        %v650 = vsel %vm649, %v641, 0.0
        %651 = vadd.xlane.f32.xlu0 %v650
        %v652 = vpop.xlane.xlu0 %651
        %v653 = vsel %vm649, %v644, 0.0
        %654 = vadd.xlane.f32.xlu0 %v653
        %v655 = vpop.xlane.xlu0 %654
        %v656 = vrcp.pop 32.0
        %v657 = vmul.f32 %v652, %v656
        %v658 = vmul.f32 %v655, %v656
        %v659 = vmul.f32 %v641, %v641
        %v660 = vmul.f32 %v644, %v644
        %v661 = vsel %vm649, %v659, 0.0
        %662 = vadd.xlane.f32.xlu0 %v661
        %v663 = vpop.xlane.xlu0 %662
        %v664 = vsel %vm649, %v660, 0.0
        %665 = vadd.xlane.f32.xlu0 %v664
        %v666 = vpop.xlane.xlu0 %665
        %v667 = vmul.f32 %v663, %v656
        %v668 = vmul.f32 %v666, %v656
        %v669 = vmul.f32 %v657, %v657
        %v670 = vmul.f32 %v658, %v658
        %v671 = vsub.f32 %v667, %v669
        %v672 = vsub.f32 %v668, %v670
        %v673 = vsub.f32 %v641, %v657
        %v674 = vsub.f32 %v644, %v658
        %v675 = vadd.f32 %v671, 1e-05
        %v676 = vadd.f32 %v672, 1e-05
        %v677 = vrsqrt.pop %v675
        %v678 = vrsqrt.pop %v676
        %v679 = vmul.f32 %v673, %v677
        %v680 = vmul.f32 %v674, %v678
        %v682 = vlaneseq
        %v683 = vshrl.u32 %v682, 7
        %v684 = vsub.s32 0, %v683
        %v685 = vrot.slane %v647, %v684
        %v687 = vmul.f32 %v679, %v685
        %v688 = vmul.f32 %v680, %v685
        %v690 = vlaneseq
        %v691 = vshrl.u32 %v690, 7
        %v692 = vsub.s32 0, %v691
        %v693 = vrot.slane %v648, %v692
        %v695 = vadd.f32 %v687, %v693
        %v696 = vadd.f32 %v688, %v693
        %v697 = vld [vmem:[%s5] sm:$0x1]
        %v698 = vld [vmem:[%s6] sm:$0x1]
        %v699 = vsel %vm649, %v695, 0.0
        %700 = vadd.xlane.f32.xlu0 %v699
        %v701 = vpop.xlane.xlu0 %700
        %v702 = vsel %vm649, %v696, 0.0
        %703 = vadd.xlane.f32.xlu0 %v702
        %v704 = vpop.xlane.xlu0 %703
        %v705 = vmul.f32 %v701, %v656
        %v706 = vmul.f32 %v704, %v656
        %v707 = vmul.f32 %v695, %v695
        %v708 = vmul.f32 %v696, %v696
        %v709 = vsel %vm649, %v707, 0.0
        %710 = vadd.xlane.f32.xlu0 %v709
        %v711 = vpop.xlane.xlu0 %710
        %v712 = vsel %vm649, %v708, 0.0
        %713 = vadd.xlane.f32.xlu0 %v712
        %v714 = vpop.xlane.xlu0 %713
        %v715 = vmul.f32 %v711, %v656
        %v716 = vmul.f32 %v714, %v656
        %v717 = vmul.f32 %v705, %v705
        %v718 = vmul.f32 %v706, %v706
        %v719 = vsub.f32 %v715, %v717
        %v720 = vsub.f32 %v716, %v718
        %v721 = vsub.f32 %v695, %v705
        %v722 = vsub.f32 %v696, %v706
        %v723 = vadd.f32 %v719, 1e-05
        %v724 = vadd.f32 %v720, 1e-05
        %v725 = vrsqrt.pop %v723
        %v726 = vrsqrt.pop %v724
        %v727 = vmul.f32 %v721, %v725
        %v728 = vmul.f32 %v722, %v726
        %v730 = vlaneseq
        %v731 = vshrl.u32 %v730, 7
        %v732 = vsub.s32 0, %v731
        %v733 = vrot.slane %v697, %v732
        %v735 = vmul.f32 %v727, %v733
        %v736 = vmul.f32 %v728, %v733
        %v738 = vlaneseq
        %v739 = vshrl.u32 %v738, 7
        %v740 = vsub.s32 0, %v739
        %v741 = vrot.slane %v698, %v740
        %v743 = vadd.f32 %v735, %v741
        %v744 = vadd.f32 %v736, %v741
        %v745 = vpack.c.bf16 %v744, %v743
        %v746 = vld [vmem:[%s7] sm:$0xf]
        %v747 = vld [vmem:[%s7 + $0x4] sm:$0xf]
        %v748 = vld [vmem:[%s7 + $0x8] sm:$0xf]
        %v749 = vld [vmem:[%s7 + $0xc] sm:$0xf]
        %v750 = vld [vmem:[%s8] sm:$0x1]
        %v752 = vlaneseq
        %v753 = vshrl.u32 %v752, 7
        %v754 = vsub.s32 0, %v753
        %v755 = vrot.slane %v750, %v754
        %v761 = vunpack.c.l.b16 %v746
        %v762 = vunpack.c.l.b16 %v747
        %v763 = vunpack.c.l.b16 %v748
        %v764 = vunpack.c.l.b16 %v749
        %v765 = vpack.c.b16 %v762, %v761
        %v766 = vpack.c.b16 %v764, %v763
        %v770 = vsel %vm649, %v745, 0
        %772 = vmatprep.subr.bf16.mxu0 0
        %773 = vmatpush1.bf16.msra.mxu0 %v765
        %774 = vmatprep.subr.bf16.mxu0 0
        %775 = vmatpush1.bf16.msra.mxu0 %v766
        %776 = vmatprep.subr.bf16.mxu0 0
        %777 = vmatpush1.bf16.msra.mxu0 0
        %778 = vmatprep.subr.bf16.mxu0 0
        %779 = vmatpush1.bf16.msra.mxu0 0
        %780 = vmatprep.subr.bf16.mxu0 0
        %781 = vmatpush1.bf16.msra.mxu0 0
        %782 = vmatprep.subr.bf16.mxu0 0
        %783 = vmatpush1.bf16.msra.mxu0 0
        %784 = vmatprep.subr.bf16.mxu0 0
        %785 = vmatpush1.bf16.msra.mxu0 0
        %786 = vmatprep.subr.bf16.mxu0 0
        %787 = vmatpush1.bf16.msra.mxu0 0
        %788 = vmatprep.subr.bf16.mxu0 0
        %789 = vmatpush1.bf16.msra.mxu0 0
        %790 = vmatprep.subr.bf16.mxu0 0
        %791 = vmatpush1.bf16.msra.mxu0 0
        %792 = vmatprep.subr.bf16.mxu0 0
        %793 = vmatpush1.bf16.msra.mxu0 0
        %794 = vmatprep.subr.bf16.mxu0 0
        %795 = vmatpush1.bf16.msra.mxu0 0
        %796 = vmatprep.subr.bf16.mxu0 0
        %797 = vmatpush1.bf16.msra.mxu0 0
        %798 = vmatprep.subr.bf16.mxu0 0
        %799 = vmatpush1.bf16.msra.mxu0 0
        %800 = vmatprep.subr.bf16.mxu0 0
        %801 = vmatpush1.bf16.msra.mxu0 0
        %802 = vmatprep.subr.bf16.mxu0 0
        %803 = vmatpush1.bf16.msra.mxu0 0
        %804 = vmatprep.mubr.bf16.mxu0 0
        %805 = vmatmul.mubr.bf16.gmra.mrb[0].mxu0 %v770
        %v806 = vpop.f32.mrb[0].mxu0
        %v807 = vadd.f32 %v755, %v806
        %v808 = vpop.f32.mrb[0].mxu0
        %v809 = vpop.f32.mrb[0].mxu0
        %v810 = vadd.f32 %v755, %v809
        %v811 = vpop.f32.mrb[0].mxu0
        %812 = vdwg.mxu0
        %v813 = vmul.f32 %v807, 0.25
        %v814 = vmul.f32 %v810, 0.25
        %v815 = vpack.c.bf16 %v814, %v813
        %v816 = vpack.c.bf16 %v810, %v807
        %818 = vrot.lane.b32.xlu0 %v816, 96
        %v819 = vpop.permute.xlu0 %818
        %vm820 = vcmask 130048
        %v822 = vsel %vm820, %v815, 0
        %v825 = vsel %vm820, %v819, 0
        %827 = vmatprep.subr.bf16.mxu0 0
        %828 = vmatpush1.bf16.xpose.msra.mxu0 %v825
        %829 = vmatprep.subr.bf16.mxu0 0
        %830 = vmatpush1.bf16.xpose.msra.mxu0 0
        %831 = vmatprep.subr.bf16.mxu0 0
        %832 = vmatpush1.bf16.xpose.msra.mxu0 0
        %833 = vmatprep.subr.bf16.mxu0 0
        %834 = vmatpush1.bf16.xpose.msra.mxu0 0
        %835 = vmatprep.subr.bf16.mxu0 0
        %836 = vmatpush1.bf16.xpose.msra.mxu0 0
        %837 = vmatprep.subr.bf16.mxu0 0
        %838 = vmatpush1.bf16.xpose.msra.mxu0 0
        %839 = vmatprep.subr.bf16.mxu0 0
        %840 = vmatpush1.bf16.xpose.msra.mxu0 0
        %841 = vmatprep.subr.bf16.mxu0 0
        %842 = vmatpush1.bf16.xpose.msra.mxu0 0
        %843 = vmatprep.subr.bf16.mxu0 0
        %844 = vmatpush1.bf16.xpose.msra.mxu0 0
        %845 = vmatprep.subr.bf16.mxu0 0
        %846 = vmatpush1.bf16.xpose.msra.mxu0 0
        %847 = vmatprep.subr.bf16.mxu0 0
        %848 = vmatpush1.bf16.xpose.msra.mxu0 0
        %849 = vmatprep.subr.bf16.mxu0 0
        %850 = vmatpush1.bf16.xpose.msra.mxu0 0
        %851 = vmatprep.subr.bf16.mxu0 0
        %852 = vmatpush1.bf16.xpose.msra.mxu0 0
        %853 = vmatprep.subr.bf16.mxu0 0
        %854 = vmatpush1.bf16.xpose.msra.mxu0 0
        %855 = vmatprep.subr.bf16.mxu0 0
        %856 = vmatpush1.bf16.xpose.msra.mxu0 0
        %857 = vmatprep.subr.bf16.mxu0 0
        %858 = vmatpush1.bf16.xpose.msra.mxu0 0
        %859 = vmatprep.mubr.bf16.mxu0 0
        %860 = vmatmul.mubr.bf16.gmra.mrb[0].mxu0 %v822
        %v861 = vpop.f32.mrb[0].mxu0
        %v862 = vadd.f32 0.0, %v861
        %v863 = vpop.f32.mrb[0].mxu0
        %v864 = vpop.f32.mrb[0].mxu0
        %v865 = vadd.f32 0.0, %v864
        %v866 = vpop.f32.mrb[0].mxu0
        %867 = vdwg.mxu0
        %v868 = vsel %vm820, %v862, -inf
        %869 = vmax.xlane.f32.xlu0 %v868
        %v870 = vpop.xlane.xlu0 %869
        %v871 = vsel %vm820, %v865, -inf
        %872 = vmax.xlane.f32.xlu0 %v871
        %v873 = vpop.xlane.xlu0 %872
        %v874 = vsub.f32 %v862, %v870
        %v875 = vsub.f32 %v865, %v873
        %v876 = vmul.f32 %v874, 1.442695
        %v877 = vpow.pop %v876
        %v878 = vmul.f32 %v875, 1.442695
        %v879 = vpow.pop %v878
        %v880 = vsel %vm820, %v877, 0.0
        %881 = vadd.xlane.f32.xlu0 %v880
        %v882 = vpop.xlane.xlu0 %881
        %v883 = vsel %vm820, %v879, 0.0
        %884 = vadd.xlane.f32.xlu0 %v883
        %v885 = vpop.xlane.xlu0 %884
        %v886 = vpack.c.bf16 %v879, %v877
        %887 = vrot.lane.b32.xlu0 %v816, 64
        %v888 = vpop.permute.xlu0 %887
        %v891 = vsel %vm820, %v886, 0
        %893 = vmatprep.subr.bf16.mxu0 0
        %894 = vmatpush1.bf16.msra.mxu0 %v888
        %895 = vmatprep.subr.bf16.mxu0 0
        %896 = vmatpush1.bf16.msra.mxu0 0
        %897 = vmatprep.subr.bf16.mxu0 0
        %898 = vmatpush1.bf16.msra.mxu0 0
        %899 = vmatprep.subr.bf16.mxu0 0
        %900 = vmatpush1.bf16.msra.mxu0 0
        %901 = vmatprep.subr.bf16.mxu0 0
        %902 = vmatpush1.bf16.msra.mxu0 0
        %903 = vmatprep.subr.bf16.mxu0 0
        %904 = vmatpush1.bf16.msra.mxu0 0
        %905 = vmatprep.subr.bf16.mxu0 0
        %906 = vmatpush1.bf16.msra.mxu0 0
        %907 = vmatprep.subr.bf16.mxu0 0
        %908 = vmatpush1.bf16.msra.mxu0 0
        %909 = vmatprep.subr.bf16.mxu0 0
        %910 = vmatpush1.bf16.msra.mxu0 0
        %911 = vmatprep.subr.bf16.mxu0 0
        %912 = vmatpush1.bf16.msra.mxu0 0
        %913 = vmatprep.subr.bf16.mxu0 0
        %914 = vmatpush1.bf16.msra.mxu0 0
        %915 = vmatprep.subr.bf16.mxu0 0
        %916 = vmatpush1.bf16.msra.mxu0 0
        %917 = vmatprep.subr.bf16.mxu0 0
        %918 = vmatpush1.bf16.msra.mxu0 0
        %919 = vmatprep.subr.bf16.mxu0 0
        %920 = vmatpush1.bf16.msra.mxu0 0
        %921 = vmatprep.subr.bf16.mxu0 0
        %922 = vmatpush1.bf16.msra.mxu0 0
        %923 = vmatprep.subr.bf16.mxu0 0
        %924 = vmatpush1.bf16.msra.mxu0 0
        %925 = vmatprep.mubr.bf16.mxu0 0
        %926 = vmatmul.mubr.bf16.gmra.mrb[0].mxu0 %v891
        %v927 = vpop.f32.mrb[0].mxu0
        %v928 = vadd.f32 0.0, %v927
        %v929 = vpop.f32.mrb[0].mxu0
        %v930 = vpop.f32.mrb[0].mxu0
        %v931 = vadd.f32 0.0, %v930
        %v932 = vpop.f32.mrb[0].mxu0
        %933 = vdwg.mxu0
        %v934 = vrcp.pop %v882
        %v935 = vrcp.pop %v885
        %v936 = vmul.f32 %v928, %v934
        %v937 = vmul.f32 %v931, %v935
        %939 = vrot.lane.b32.xlu0 %v815, 112
        %v940 = vpop.permute.xlu0 %939
        %941 = vrot.lane.b32.xlu0 %v816, 80
        %v942 = vpop.permute.xlu0 %941
        %v944 = vsel %vm820, %v940, 0
        %v947 = vsel %vm820, %v942, 0
        %949 = vmatprep.subr.bf16.mxu0 0
        %950 = vmatpush1.bf16.xpose.msra.mxu0 %v947
        %951 = vmatprep.subr.bf16.mxu0 0
        %952 = vmatpush1.bf16.xpose.msra.mxu0 0
        %953 = vmatprep.subr.bf16.mxu0 0
        %954 = vmatpush1.bf16.xpose.msra.mxu0 0
        %955 = vmatprep.subr.bf16.mxu0 0
        %956 = vmatpush1.bf16.xpose.msra.mxu0 0
        %957 = vmatprep.subr.bf16.mxu0 0
        %958 = vmatpush1.bf16.xpose.msra.mxu0 0
        %959 = vmatprep.subr.bf16.mxu0 0
        %960 = vmatpush1.bf16.xpose.msra.mxu0 0
        %961 = vmatprep.subr.bf16.mxu0 0
        %962 = vmatpush1.bf16.xpose.msra.mxu0 0
        %963 = vmatprep.subr.bf16.mxu0 0
        %964 = vmatpush1.bf16.xpose.msra.mxu0 0
        %965 = vmatprep.subr.bf16.mxu0 0
        %966 = vmatpush1.bf16.xpose.msra.mxu0 0
        %967 = vmatprep.subr.bf16.mxu0 0
        %968 = vmatpush1.bf16.xpose.msra.mxu0 0
        %969 = vmatprep.subr.bf16.mxu0 0
        %970 = vmatpush1.bf16.xpose.msra.mxu0 0
        %971 = vmatprep.subr.bf16.mxu0 0
        %972 = vmatpush1.bf16.xpose.msra.mxu0 0
        %973 = vmatprep.subr.bf16.mxu0 0
        %974 = vmatpush1.bf16.xpose.msra.mxu0 0
        %975 = vmatprep.subr.bf16.mxu0 0
        %976 = vmatpush1.bf16.xpose.msra.mxu0 0
        %977 = vmatprep.subr.bf16.mxu0 0
        %978 = vmatpush1.bf16.xpose.msra.mxu0 0
        %979 = vmatprep.subr.bf16.mxu0 0
        %980 = vmatpush1.bf16.xpose.msra.mxu0 0
        %981 = vmatprep.mubr.bf16.mxu0 0
        %982 = vmatmul.mubr.bf16.gmra.mrb[0].mxu0 %v944
        %v983 = vpop.f32.mrb[0].mxu0
        %v984 = vadd.f32 0.0, %v983
        %v985 = vpop.f32.mrb[0].mxu0
        %v986 = vpop.f32.mrb[0].mxu0
        %v987 = vadd.f32 0.0, %v986
        %v988 = vpop.f32.mrb[0].mxu0
        %989 = vdwg.mxu0
        %v990 = vsel %vm820, %v984, -inf
        %991 = vmax.xlane.f32.xlu0 %v990
        %v992 = vpop.xlane.xlu0 %991
        %v993 = vsel %vm820, %v987, -inf
        %994 = vmax.xlane.f32.xlu0 %v993
        %v995 = vpop.xlane.xlu0 %994
        %v996 = vsub.f32 %v984, %v992
        %v997 = vsub.f32 %v987, %v995
        %v998 = vmul.f32 %v996, 1.442695
        %v999 = vpow.pop %v998
        %v1000 = vmul.f32 %v997, 1.442695
        %v1001 = vpow.pop %v1000
        %v1002 = vsel %vm820, %v999, 0.0
        %1003 = vadd.xlane.f32.xlu0 %v1002
        %v1004 = vpop.xlane.xlu0 %1003
        %v1005 = vsel %vm820, %v1001, 0.0
        %1006 = vadd.xlane.f32.xlu0 %v1005
        %v1007 = vpop.xlane.xlu0 %1006
        %v1008 = vpack.c.bf16 %v1001, %v999
        %1009 = vrot.lane.b32.xlu0 %v816, 48
        %v1010 = vpop.permute.xlu0 %1009
        %v1013 = vsel %vm820, %v1008, 0
        %1015 = vmatprep.subr.bf16.mxu0 0
        %1016 = vmatpush1.bf16.msra.mxu0 %v1010
        %1017 = vmatprep.subr.bf16.mxu0 0
        %1018 = vmatpush1.bf16.msra.mxu0 0
        %1019 = vmatprep.subr.bf16.mxu0 0
        %1020 = vmatpush1.bf16.msra.mxu0 0
        %1021 = vmatprep.subr.bf16.mxu0 0
        %1022 = vmatpush1.bf16.msra.mxu0 0
        %1023 = vmatprep.subr.bf16.mxu0 0
        %1024 = vmatpush1.bf16.msra.mxu0 0
        %1025 = vmatprep.subr.bf16.mxu0 0
        %1026 = vmatpush1.bf16.msra.mxu0 0
        %1027 = vmatprep.subr.bf16.mxu0 0
        %1028 = vmatpush1.bf16.msra.mxu0 0
        %1029 = vmatprep.subr.bf16.mxu0 0
        %1030 = vmatpush1.bf16.msra.mxu0 0
        %1031 = vmatprep.subr.bf16.mxu0 0
        %1032 = vmatpush1.bf16.msra.mxu0 0
        %1033 = vmatprep.subr.bf16.mxu0 0
        %1034 = vmatpush1.bf16.msra.mxu0 0
        %1035 = vmatprep.subr.bf16.mxu0 0
        %1036 = vmatpush1.bf16.msra.mxu0 0
        %1037 = vmatprep.subr.bf16.mxu0 0
        %1038 = vmatpush1.bf16.msra.mxu0 0
        %1039 = vmatprep.subr.bf16.mxu0 0
        %1040 = vmatpush1.bf16.msra.mxu0 0
        %1041 = vmatprep.subr.bf16.mxu0 0
        %1042 = vmatpush1.bf16.msra.mxu0 0
        %1043 = vmatprep.subr.bf16.mxu0 0
        %1044 = vmatpush1.bf16.msra.mxu0 0
        %1045 = vmatprep.subr.bf16.mxu0 0
        %1046 = vmatpush1.bf16.msra.mxu0 0
        %1047 = vmatprep.mubr.bf16.mxu0 0
        %1048 = vmatmul.mubr.bf16.gmra.mrb[0].mxu0 %v1013
        %v1049 = vpop.f32.mrb[0].mxu0
        %v1050 = vadd.f32 0.0, %v1049
        %v1051 = vpop.f32.mrb[0].mxu0
        %v1052 = vpop.f32.mrb[0].mxu0
        %v1053 = vadd.f32 0.0, %v1052
        %v1054 = vpop.f32.mrb[0].mxu0
        %1055 = vdwg.mxu0
        %v1056 = vrcp.pop %v1004
        %v1057 = vrcp.pop %v1007
        %v1058 = vmul.f32 %v1050, %v1056
        %v1059 = vmul.f32 %v1053, %v1057
        %1062 = vrot.lane.b32.xlu0 %v1058, 16
        %v1063 = vpop.permute.xlu0 %1062
        %1064 = vrot.lane.b32.xlu0 %v1059, 16
        %v1065 = vpop.permute.xlu0 %1064
        %v1068 = vsel %vm820, %v936, %v1063
        %v1069 = vsel %vm820, %v937, %v1065
        %v1070 = vpack.c.bf16 %v1069, %v1068
        %v1071 = vld [vmem:[%s9] sm:$0xf]
        %v1072 = vld [vmem:[%s9 + $0x4] sm:$0xf]
        %v1073 = vld [vmem:[%s9 + $0x8] sm:$0xf]
        %v1074 = vld [vmem:[%s9 + $0xc] sm:$0xf]
        %v1079 = vunpack.c.l.b16 %v1071
        %v1080 = vunpack.c.l.b16 %v1072
        %v1081 = vunpack.c.l.b16 %v1073
        %v1082 = vunpack.c.l.b16 %v1074
        %v1083 = vpack.c.b16 %v1080, %v1079
        %v1084 = vpack.c.b16 %v1082, %v1081
        %v1088 = vsel %vm649, %v1070, 0
        %1090 = vmatprep.subr.bf16.mxu0 0
        %1091 = vmatpush1.bf16.msra.mxu0 %v1083
        %1092 = vmatprep.subr.bf16.mxu0 0
        %1093 = vmatpush1.bf16.msra.mxu0 %v1084
        %1094 = vmatprep.subr.bf16.mxu0 0
        %1095 = vmatpush1.bf16.msra.mxu0 0
        %1096 = vmatprep.subr.bf16.mxu0 0
        %1097 = vmatpush1.bf16.msra.mxu0 0
        %1098 = vmatprep.subr.bf16.mxu0 0
        %1099 = vmatpush1.bf16.msra.mxu0 0
        %1100 = vmatprep.subr.bf16.mxu0 0
        %1101 = vmatpush1.bf16.msra.mxu0 0
        %1102 = vmatprep.subr.bf16.mxu0 0
        %1103 = vmatpush1.bf16.msra.mxu0 0
        %1104 = vmatprep.subr.bf16.mxu0 0
        %1105 = vmatpush1.bf16.msra.mxu0 0
        %1106 = vmatprep.subr.bf16.mxu0 0
        %1107 = vmatpush1.bf16.msra.mxu0 0
        %1108 = vmatprep.subr.bf16.mxu0 0
        %1109 = vmatpush1.bf16.msra.mxu0 0
        %1110 = vmatprep.subr.bf16.mxu0 0
        %1111 = vmatpush1.bf16.msra.mxu0 0
        %1112 = vmatprep.subr.bf16.mxu0 0
        %1113 = vmatpush1.bf16.msra.mxu0 0
        %1114 = vmatprep.subr.bf16.mxu0 0
        %1115 = vmatpush1.bf16.msra.mxu0 0
        %1116 = vmatprep.subr.bf16.mxu0 0
        %1117 = vmatpush1.bf16.msra.mxu0 0
        %1118 = vmatprep.subr.bf16.mxu0 0
        %1119 = vmatpush1.bf16.msra.mxu0 0
        %1120 = vmatprep.subr.bf16.mxu0 0
        %1121 = vmatpush1.bf16.msra.mxu0 0
        %1122 = vmatprep.mubr.bf16.mxu0 0
        %1123 = vmatmul.mubr.bf16.gmra.mrb[0].mxu0 %v1088
        %v1124 = vpop.f32.mrb[0].mxu0
        %v1125 = vadd.f32 0.0, %v1124
        %v1126 = vpop.f32.mrb[0].mxu0
        %v1127 = vpop.f32.mrb[0].mxu0
        %v1128 = vadd.f32 0.0, %v1127
        %v1129 = vpop.f32.mrb[0].mxu0
        %1130 = vdwg.mxu0
        %v1131 = vadd.f32 %v695, %v1125
        %v1132 = vadd.f32 %v696, %v1128
        %v1133 = vld [vmem:[%s10] sm:$0x1]
        %v1135 = vlaneseq
        %v1136 = vshrl.u32 %v1135, 7
        %v1137 = vsub.s32 0, %v1136
        %v1138 = vrot.slane %v1133, %v1137
        %v1140 = vadd.f32 %v1131, %v1138
        %v1141 = vadd.f32 %v1132, %v1138
        %v1142 = vld [vmem:[%s11] sm:$0x1]
        %v1143 = vld [vmem:[%s12] sm:$0x1]
        %v1144 = vsel %vm649, %v1140, 0.0
        %1145 = vadd.xlane.f32.xlu0 %v1144
        %v1146 = vpop.xlane.xlu0 %1145
        %v1147 = vsel %vm649, %v1141, 0.0
        %1148 = vadd.xlane.f32.xlu0 %v1147
        %v1149 = vpop.xlane.xlu0 %1148
        %v1150 = vmul.f32 %v1146, %v656
        %v1151 = vmul.f32 %v1149, %v656
        %v1152 = vmul.f32 %v1140, %v1140
        %v1153 = vmul.f32 %v1141, %v1141
        %v1154 = vsel %vm649, %v1152, 0.0
        %1155 = vadd.xlane.f32.xlu0 %v1154
        %v1156 = vpop.xlane.xlu0 %1155
        %v1157 = vsel %vm649, %v1153, 0.0
        %1158 = vadd.xlane.f32.xlu0 %v1157
        %v1159 = vpop.xlane.xlu0 %1158
        %v1160 = vmul.f32 %v1156, %v656
        %v1161 = vmul.f32 %v1159, %v656
        %v1162 = vmul.f32 %v1150, %v1150
        %v1163 = vmul.f32 %v1151, %v1151
        %v1164 = vsub.f32 %v1160, %v1162
        %v1165 = vsub.f32 %v1161, %v1163
        %v1166 = vsub.f32 %v1140, %v1150
        %v1167 = vsub.f32 %v1141, %v1151
        %v1168 = vadd.f32 %v1164, 1e-05
        %v1169 = vadd.f32 %v1165, 1e-05
        %v1170 = vrsqrt.pop %v1168
        %v1171 = vrsqrt.pop %v1169
        %v1172 = vmul.f32 %v1166, %v1170
        %v1173 = vmul.f32 %v1167, %v1171
        %v1175 = vlaneseq
        %v1176 = vshrl.u32 %v1175, 7
        %v1177 = vsub.s32 0, %v1176
        %v1178 = vrot.slane %v1142, %v1177
        %v1180 = vmul.f32 %v1172, %v1178
        %v1181 = vmul.f32 %v1173, %v1178
        %v1183 = vlaneseq
        %v1184 = vshrl.u32 %v1183, 7
        %v1185 = vsub.s32 0, %v1184
        %v1186 = vrot.slane %v1143, %v1185
        %v1188 = vadd.f32 %v1180, %v1186
        %v1189 = vadd.f32 %v1181, %v1186
        %v1190 = vpack.c.bf16 %v1189, %v1188
        %v1191 = vld [vmem:[%s13] sm:$0xf]
        %v1192 = vld [vmem:[%s13 + $0x4] sm:$0xf]
        %v1193 = vld [vmem:[%s13 + $0x8] sm:$0xf]
        %v1194 = vld [vmem:[%s13 + $0xc] sm:$0xf]
        %v1195 = vld [vmem:[%s14] sm:$0x1]
        %v1197 = vlaneseq
        %v1198 = vshrl.u32 %v1197, 7
        %v1199 = vsub.s32 0, %v1198
        %v1200 = vrot.slane %v1195, %v1199
        %v1206 = vunpack.c.l.b16 %v1191
        %v1207 = vunpack.c.l.b16 %v1192
        %v1208 = vunpack.c.l.b16 %v1193
        %v1209 = vunpack.c.l.b16 %v1194
        %v1210 = vpack.c.b16 %v1207, %v1206
        %v1211 = vpack.c.b16 %v1209, %v1208
        %v1215 = vsel %vm649, %v1190, 0
        %1217 = vmatprep.subr.bf16.mxu0 0
        %1218 = vmatpush1.bf16.msra.mxu0 %v1210
        %1219 = vmatprep.subr.bf16.mxu0 0
        %1220 = vmatpush1.bf16.msra.mxu0 %v1211
        %1221 = vmatprep.subr.bf16.mxu0 0
        %1222 = vmatpush1.bf16.msra.mxu0 0
        %1223 = vmatprep.subr.bf16.mxu0 0
        %1224 = vmatpush1.bf16.msra.mxu0 0
        %1225 = vmatprep.subr.bf16.mxu0 0
        %1226 = vmatpush1.bf16.msra.mxu0 0
        %1227 = vmatprep.subr.bf16.mxu0 0
        %1228 = vmatpush1.bf16.msra.mxu0 0
        %1229 = vmatprep.subr.bf16.mxu0 0
        %1230 = vmatpush1.bf16.msra.mxu0 0
        %1231 = vmatprep.subr.bf16.mxu0 0
        %1232 = vmatpush1.bf16.msra.mxu0 0
        %1233 = vmatprep.subr.bf16.mxu0 0
        %1234 = vmatpush1.bf16.msra.mxu0 0
        %1235 = vmatprep.subr.bf16.mxu0 0
        %1236 = vmatpush1.bf16.msra.mxu0 0
        %1237 = vmatprep.subr.bf16.mxu0 0
        %1238 = vmatpush1.bf16.msra.mxu0 0
        %1239 = vmatprep.subr.bf16.mxu0 0
        %1240 = vmatpush1.bf16.msra.mxu0 0
        %1241 = vmatprep.subr.bf16.mxu0 0
        %1242 = vmatpush1.bf16.msra.mxu0 0
        %1243 = vmatprep.subr.bf16.mxu0 0
        %1244 = vmatpush1.bf16.msra.mxu0 0
        %1245 = vmatprep.subr.bf16.mxu0 0
        %1246 = vmatpush1.bf16.msra.mxu0 0
        %1247 = vmatprep.subr.bf16.mxu0 0
        %1248 = vmatpush1.bf16.msra.mxu0 0
        %1249 = vmatprep.mubr.bf16.mxu0 0
        %1250 = vmatmul.mubr.bf16.gmra.mrb[0].mxu0 %v1215
        %v1251 = vpop.f32.mrb[0].mxu0
        %v1252 = vadd.f32 %v1200, %v1251
        %v1253 = vpop.f32.mrb[0].mxu0
        %v1254 = vpop.f32.mrb[0].mxu0
        %v1255 = vadd.f32 %v1200, %v1254
        %v1256 = vpop.f32.mrb[0].mxu0
        %1257 = vdwg.mxu0
        %v1258 = vmul.f32 %v1252, 0.5
        %v1259 = vmul.f32 %v1255, 0.5
        %v1260 = vmul.f32 %v1252, 0.044715
        %v1261 = vmul.f32 %v1255, 0.044715
        %v1262 = vmul.f32 %v1260, %v1252
        %v1263 = vmul.f32 %v1261, %v1255
        %v1264 = vmul.f32 %v1262, %v1252
        %v1265 = vmul.f32 %v1263, %v1255
        %v1266 = vadd.f32 %v1252, %v1264
        %v1267 = vadd.f32 %v1255, %v1265
        %v1268 = vmul.f32 %v1266, 0.7978846
        %v1269 = vmul.f32 %v1267, 0.7978846
        %v1270 = vtanh.pop %v1268
        %v1271 = vtanh.pop %v1269
        %v1272 = vadd.f32 %v1270, 1.0
        %v1273 = vadd.f32 %v1271, 1.0
        %v1274 = vmul.f32 %v1258, %v1272
        %v1275 = vmul.f32 %v1259, %v1273
        %v1276 = vpack.c.bf16 %v1275, %v1274
        %v1277 = vld [vmem:[%s15] sm:$0xf]
        %v1278 = vld [vmem:[%s15 + $0x4] sm:$0xf]
        %v1279 = vld [vmem:[%s15 + $0x8] sm:$0xf]
        %v1280 = vld [vmem:[%s15 + $0xc] sm:$0xf]
        %v1281 = vld [vmem:[%s15 + $0x10] sm:$0xf]
        %v1282 = vld [vmem:[%s15 + $0x14] sm:$0xf]
        %v1283 = vld [vmem:[%s15 + $0x18] sm:$0xf]
        %v1284 = vld [vmem:[%s15 + $0x1c] sm:$0xf]
        %v1285 = vld [vmem:[%s15 + $0x20] sm:$0xf]
        %v1286 = vld [vmem:[%s15 + $0x24] sm:$0xf]
        %v1287 = vld [vmem:[%s15 + $0x28] sm:$0xf]
        %v1288 = vld [vmem:[%s15 + $0x2c] sm:$0xf]
        %v1289 = vld [vmem:[%s15 + $0x30] sm:$0xf]
        %v1290 = vld [vmem:[%s15 + $0x34] sm:$0xf]
        %v1291 = vld [vmem:[%s15 + $0x38] sm:$0xf]
        %v1292 = vld [vmem:[%s15 + $0x3c] sm:$0xf]
        %v1309 = vunpack.c.l.b16 %v1277
        %v1310 = vunpack.c.l.b16 %v1278
        %v1311 = vunpack.c.l.b16 %v1279
        %v1312 = vunpack.c.l.b16 %v1280
        %v1313 = vunpack.c.l.b16 %v1281
        %v1314 = vunpack.c.l.b16 %v1282
        %v1315 = vunpack.c.l.b16 %v1283
        %v1316 = vunpack.c.l.b16 %v1284
        %v1317 = vunpack.c.l.b16 %v1285
        %v1318 = vunpack.c.l.b16 %v1286
        %v1319 = vunpack.c.l.b16 %v1287
        %v1320 = vunpack.c.l.b16 %v1288
        %v1321 = vunpack.c.l.b16 %v1289
        %v1322 = vunpack.c.l.b16 %v1290
        %v1323 = vunpack.c.l.b16 %v1291
        %v1324 = vunpack.c.l.b16 %v1292
        %v1325 = vpack.c.b16 %v1310, %v1309
        %v1326 = vpack.c.b16 %v1312, %v1311
        %v1327 = vpack.c.b16 %v1314, %v1313
        %v1328 = vpack.c.b16 %v1316, %v1315
        %v1329 = vpack.c.b16 %v1318, %v1317
        %v1330 = vpack.c.b16 %v1320, %v1319
        %v1331 = vpack.c.b16 %v1322, %v1321
        %v1332 = vpack.c.b16 %v1324, %v1323
        %1341 = vmatprep.subr.bf16.mxu0 0
        %1342 = vmatpush1.bf16.msra.mxu0 %v1325
        %1343 = vmatprep.subr.bf16.mxu0 0
        %1344 = vmatpush1.bf16.msra.mxu0 %v1326
        %1345 = vmatprep.subr.bf16.mxu0 0
        %1346 = vmatpush1.bf16.msra.mxu0 %v1327
        %1347 = vmatprep.subr.bf16.mxu0 0
        %1348 = vmatpush1.bf16.msra.mxu0 %v1328
        %1349 = vmatprep.subr.bf16.mxu0 0
        %1350 = vmatpush1.bf16.msra.mxu0 %v1329
        %1351 = vmatprep.subr.bf16.mxu0 0
        %1352 = vmatpush1.bf16.msra.mxu0 %v1330
        %1353 = vmatprep.subr.bf16.mxu0 0
        %1354 = vmatpush1.bf16.msra.mxu0 %v1331
        %1355 = vmatprep.subr.bf16.mxu0 0
        %1356 = vmatpush1.bf16.msra.mxu0 %v1332
        %1357 = vmatprep.subr.bf16.mxu0 0
        %1358 = vmatpush1.bf16.msra.mxu0 0
        %1359 = vmatprep.subr.bf16.mxu0 0
        %1360 = vmatpush1.bf16.msra.mxu0 0
        %1361 = vmatprep.subr.bf16.mxu0 0
        %1362 = vmatpush1.bf16.msra.mxu0 0
        %1363 = vmatprep.subr.bf16.mxu0 0
        %1364 = vmatpush1.bf16.msra.mxu0 0
        %1365 = vmatprep.subr.bf16.mxu0 0
        %1366 = vmatpush1.bf16.msra.mxu0 0
        %1367 = vmatprep.subr.bf16.mxu0 0
        %1368 = vmatpush1.bf16.msra.mxu0 0
        %1369 = vmatprep.subr.bf16.mxu0 0
        %1370 = vmatpush1.bf16.msra.mxu0 0
        %1371 = vmatprep.subr.bf16.mxu0 0
        %1372 = vmatpush1.bf16.msra.mxu0 0
        %1373 = vmatprep.mubr.bf16.mxu0 0
        %1374 = vmatmul.mubr.bf16.gmra.mrb[0].mxu0 %v1276
        %v1375 = vpop.f32.mrb[0].mxu0
        %v1376 = vadd.f32 0.0, %v1375
        %v1377 = vpop.f32.mrb[0].mxu0
        %v1378 = vpop.f32.mrb[0].mxu0
        %v1379 = vadd.f32 0.0, %v1378
        %v1380 = vpop.f32.mrb[0].mxu0
        %1381 = vdwg.mxu0
        %v1382 = vadd.f32 %v1140, %v1376
        %v1383 = vadd.f32 %v1141, %v1379
        %v1384 = vld [vmem:[%s16] sm:$0x1]
        %v1386 = vlaneseq
        %v1387 = vshrl.u32 %v1386, 7
        %v1388 = vsub.s32 0, %v1387
        %v1389 = vrot.slane %v1384, %v1388
        %v1391 = vadd.f32 %v1382, %v1389
        %v1392 = vadd.f32 %v1383, %v1389
        %1393 = vst.msk [vmem:[%s541] sm:$0xff] %vm649, %v1391
        %1394 = vst.msk [vmem:[%s541 + $0x8] sm:$0xff] %vm649, %v1392
        %s1395 = sand.u32 %s401, 1
        %s1396 = scalar_lea.sflag [#allocation3], %s1395
        %s1397 = sand.u32 %s401, 1
        %s1398 = smul.addr %s1397, 16
        %s1399 = scalar_lea.vmem [#allocation2], %s1398
        // Predicated region
        $region89: #{tpu_custom_call.1} parent=87 // pred_check
          %p1400 = pneg %p411
        $region90: #{tpu_custom_call.1} parent=87 // pred_check_branch
          %1402 = sbr.rel (%p1400) target = $region92
        $region91: #{tpu_custom_call.1} parent=87 // pred_region
          %s1404 = ssub.s32 256, 256
          %1405 = vsyncadd %s1396, %s1404
          %s1406 = smul.addr %s31, 2
          %s1407 = smul.addr %s1406, 128
          %s1408 = scalar_lea.hbm %s17, %s1407
          %s1409 = sshll.u32 %s1399, 4
          %s1410 = int_to_ptr.vmem [resolvable:$true] %s1409
          %1415 = dma.vmem_to_hbm [thread:$0]  %s1410, 256, %s1408, %s1396, 128, 128, 8
        $region92: #{tpu_custom_call.1} parent=87 // pred_fallthru
          _
      $region88: #{tpu_custom_call.1} parent=5 // pred_fallthru
        _
      %p1416 = scmp.le.s32.totalorder 2, %s26
      // Predicated region
      $region93: #{tpu_custom_call.1} parent=5 // pred_check
        %p1417 = pneg %p1416
      $region94: #{tpu_custom_call.1} parent=5 // pred_check_branch
        %1419 = sbr.rel (%p1417) target = $region96
      $region95: #{tpu_custom_call.1} parent=5 // pred_region
        %s1420 = ssub.s32 %s26, 2
        // Predicated region
        $region97: #{tpu_custom_call.1} parent=95 // pred_check
          %p1421 = pneg %p417
        $region98: #{tpu_custom_call.1} parent=95 // pred_check_branch
          %1423 = sbr.rel (%p1421) target = $region100
        $region99: #{tpu_custom_call.1} parent=95 // pred_region
          %s1424 = sand.u32 %s402, 1
          %s1425 = scalar_lea.sflag [#allocation3], %s1424
          %s1426 = sand.u32 %s402, 1
          %s1427 = smul.addr %s1426, 16
          %s1428 = scalar_lea.vmem [#allocation2], %s1427
          %1429 = dma.done %s1425, 256
        $region100: #{tpu_custom_call.1} parent=95 // pred_fallthru
          _
      $region96: #{tpu_custom_call.1} parent=5 // pred_fallthru
        _
    $region6: #{tpu_custom_call.1} parent=1 // loop_footer
      %s30 = sadd.s32 1, %s26
    $region7: #{tpu_custom_call.1} parent=1 // loop_footer_branch
      %25 = sbr.rel target = $region3
    $region8: #{tpu_custom_call.1} parent=1 // loop_exit
      _
    %1430 = vsyncpa [#allocation3], 1
    %s1431 = scalar_lea.sflag [#allocation3], 1
    %1432 = vsyncpa %s1431, 1

</llo_original>
